<compile_context>
chip_gen: v6e
topology: v6e:2x2x1
jax: 0.10.0
libtpu: 0.0.40
codegen_flags: <defaults>
</compile_context>

<pallas_src>
import numpy as np
import jax
import jax.numpy as jnp
from jax.experimental import pallas as pl
from jax.experimental.pallas import tpu as pltpu

ATOM_FDIM = 16
BOND_FDIM = 8
LANE = 128


def _round_up(x, m):
    return ((x + m - 1) // m) * m


# ---------------------------- Pallas kernel ----------------------------

def _make_kernel(conv_num, agg_depth, tile, na_p, nm_pad):
    f32 = jnp.float32
    bf16 = jnp.bfloat16
    n_phases = conv_num + 2          # init | conv_num message-passing steps | readout

    def kernel(*refs):
        it = iter(refs)
        fa_ref = next(it)            # (tile, AF_P)  bf16  atom features (row tile)
        fb_ref = next(it)            # (nb_p, BF_P)  bf16  bond features (resident)
        adja_ref = next(it)          # (tile, na_p)  bf16  atom->atom neighbor counts
        adjb_ref = next(it)          # (tile, nb_p)  bf16  atom->bond neighbor counts
        pmask_ref = next(it)         # (tile, nm_p)  f32   atom->molecule one-hot
        wi = next(it); bi = next(it)
        wh0_a = next(it); wh0_b = next(it); bh0 = next(it)
        wh_rest = [(next(it), next(it)) for _ in range(agg_depth)]
        wah = [(next(it), next(it)) for _ in range(1 + agg_depth)]
        wo_cc = next(it); wo_as = next(it); bo = next(it)
        out_ref = next(it)           # (nm_pad, DP)  f32   resident pooling accumulator
        msg0 = next(it)              # (na_p, DP)    f32   message scratch (ping)
        msg1 = next(it)              # (na_p, DP)    f32   message scratch (pong)
        bond_ref = next(it)          # (na_p, DP)    f32   loop-invariant bond term

        phase = pl.program_id(0)
        r = pl.program_id(1)
        row0 = pl.multiple_of(r * tile, tile)
        rows = pl.ds(row0, tile)

        # row-0 (padding atom) mask for this tile
        gid = jax.lax.broadcasted_iota(jnp.int32, (tile, 1), 0) + row0
        not0 = (gid != 0).astype(f32)

        @pl.when(jnp.logical_and(phase == 0, r == 0))
        def _zero_out():
            out_ref[...] = jnp.zeros_like(out_ref)

        # -------- phase 0: input layer + loop-invariant bond half of W_h0 --------
        @pl.when(phase == 0)
        def _init():
            x0 = jnp.dot(fa_ref[...], wi[...], preferred_element_type=f32) + bi[...]
            msg0[rows, :] = jnp.maximum(x0, 0.0) * not0          # message[0,:] = 0
            # relu(concat(a_sum, b_sum)) @ W_h0 = relu(a_sum)@W[:dim] + relu(b_sum)@W[dim:]
            b_sum = jnp.dot(adjb_ref[...], fb_ref[...], preferred_element_type=f32)
            bond_ref[rows, :] = (jnp.dot(jnp.maximum(b_sum, 0.0).astype(bf16), wh0_b[...],
                                         preferred_element_type=f32) + bh0[...])

        # -------- phases 1..conv_num: message passing (ping-pong scratch) --------
        def conv_step(src, dst):
            # adj (tile, na_p) @ full message: exact equivalent of
            # index_select_ND(message, a2a).sum(dim=1) for this row tile.
            a_sum = jnp.dot(adja_ref[...].astype(f32), src[...],
                            preferred_element_type=f32)
            h = (jnp.dot(jnp.maximum(a_sum, 0.0).astype(bf16), wh0_a[...],
                         preferred_element_type=f32) + bond_ref[rows, :])
            for (w, b) in wh_rest:                               # Sequential(..., ReLU, Linear)
                h = jnp.dot(jnp.maximum(h, 0.0).astype(bf16), w[...],
                            preferred_element_type=f32) + b[...]
            # single residual copy; the un-zeroed self_message row 0 only affects
            # out[0], which is never inside any molecule scope.
            dst[rows, :] = (src[rows, :] + h) * not0

        is_conv = jnp.logical_and(phase >= 1, phase <= conv_num)

        @pl.when(jnp.logical_and(is_conv, phase % 2 == 1))
        def _conv_odd():
            conv_step(msg0, msg1)

        @pl.when(jnp.logical_and(is_conv, phase % 2 == 0))
        def _conv_even():
            conv_step(msg1, msg0)

        # -------- final phase: readout + per-molecule pooling (f32) --------
        final_src = msg0 if (conv_num % 2 == 0) else msg1        # static choice

        @pl.when(phase == n_phases - 1)
        def _readout():
            a_sum = jnp.dot(adja_ref[...].astype(f32), final_src[...],
                            preferred_element_type=f32)
            cc = fa_ref[...]
            for (w, b) in wah:                                   # Sequential(Linear, ReLU, ...)
                cc = jnp.maximum(jnp.dot(cc, w[...], preferred_element_type=f32)
                                 + b[...], 0.0).astype(bf16)
            # W_o on concat(cc, a_sum) as split-weight matmuls
            o = jnp.maximum(
                jnp.dot(cc, wo_cc[...], preferred_element_type=f32)
                + jnp.dot(a_sum.astype(bf16), wo_as[...], preferred_element_type=f32)
                + bo[...], 0.0)
            # f32 segment-sum pooling, accumulated into the resident output block
            out_ref[...] += jnp.einsum('am,ad->md', pmask_ref[...], o,
                                       preferred_element_type=f32)

    return kernel


# ---------------------------- wrapper ----------------------------

def mpn_encoder_forward(kparams, f_atoms, f_bonds, a2a, a2b, scope, *,
                        conv_num, agg_depth, num_mols, dim):
    na = f_atoms.shape[0]
    nb = f_bonds.shape[0]
    AF_P = _round_up(ATOM_FDIM, LANE)
    BF_P = _round_up(BOND_FDIM, LANE)
    DP = _round_up(dim, LANE)
    nm_pad = max(_round_up(num_mols, 8), 8)

    # row tile: 256 targets the 256x256 MXU on v6e/v7x; tiny graphs use 16-row tiles.
    tile = 256 if na >= 256 else 16
    na_p = _round_up(na, tile)
    nb_p = _round_up(nb, 8)
    n_r = na_p // tile

    # ---- one-time XLA-side precompute (moved out of the kernel per perf review) ----
    # neighbor-count matrices: adj[i, k] = #{j : a2x[i, j] == k}; the count-matrix
    # matmul reproduces index_select_ND(...).sum(dim=1) exactly (duplicates add, and
    # padding index 0 contributes exactly as it does in torch).
    adj_a = jax.nn.one_hot(a2a, na_p, dtype=jnp.float32).sum(axis=1)
    adj_b = jax.nn.one_hot(a2b, nb_p, dtype=jnp.float32).sum(axis=1)
    adj_a_p = jnp.zeros((na_p, na_p), jnp.bfloat16).at[:na].set(adj_a.astype(jnp.bfloat16))
    adj_b_p = jnp.zeros((na_p, nb_p), jnp.bfloat16).at[:na].set(adj_b.astype(jnp.bfloat16))

    # atom -> molecule one-hot pooling mask (replaces per-molecule in-kernel loop)
    atom_ids = jnp.arange(na_p, dtype=jnp.int32)[:, None]
    starts = scope[:, 0][None, :]
    sizes = scope[:, 1][None, :]
    pmask = jnp.logical_and(atom_ids >= starts,
                            atom_ids < starts + sizes).astype(jnp.float32)
    pmask_p = jnp.zeros((na_p, nm_pad), jnp.float32).at[:, :num_mols].set(pmask)

    # lane/row padding of features (bf16 MXU operands), done once in the wrapper
    fa_p = jnp.zeros((na_p, AF_P), jnp.bfloat16).at[:na, :ATOM_FDIM].set(
        f_atoms.astype(jnp.bfloat16))
    fb_p = jnp.zeros((nb_p, BF_P), jnp.bfloat16).at[:nb, :BOND_FDIM].set(
        f_bonds.astype(jnp.bfloat16))

    inputs = [fa_p, fb_p, adj_a_p, adj_b_p, pmask_p] + list(kparams)

    data_specs = [
        pl.BlockSpec((tile, AF_P), lambda p, r: (r, 0)),   # atom features, row tile
        pl.BlockSpec((nb_p, BF_P), lambda p, r: (0, 0)),   # bond features, resident
        pl.BlockSpec((tile, na_p), lambda p, r: (r, 0)),   # adj_a streamed row slab
        pl.BlockSpec((tile, nb_p), lambda p, r: (r, 0)),   # adj_b streamed row slab
        pl.BlockSpec((tile, nm_pad), lambda p, r: (r, 0)), # pooling mask row slab
    ]
    # weights: full blocks with a constant index map -> fetched once, then resident
    weight_specs = [pl.BlockSpec(kp.shape, lambda p, r: (0, 0)) for kp in kparams]

    kern = _make_kernel(conv_num, agg_depth, tile, na_p, nm_pad)
    out = pl.pallas_call(
        kern,
        out_shape=jax.ShapeDtypeStruct((nm_pad, DP), jnp.float32),
        grid=(conv_num + 2, n_r),                  # phase outer, row-tile inner
        in_specs=data_specs + weight_specs,
        out_specs=pl.BlockSpec((nm_pad, DP), lambda p, r: (0, 0)),
        scratch_shapes=[pltpu.VMEM((na_p, DP), jnp.float32),   # message ping
                        pltpu.VMEM((na_p, DP), jnp.float32),   # message pong
                        pltpu.VMEM((na_p, DP), jnp.float32)],  # bond term
        compiler_params=pltpu.CompilerParams(
            # both axes sequential: phase is a dependency chain, row tiles share the
            # per-core message scratch (must not be sharded across TensorCores).
            dimension_semantics=("arbitrary", "arbitrary"),
            vmem_limit_bytes=48 * 1024 * 1024),     # sized with headroom for v7x 64 MiB
    )(*inputs)
    return out[:num_mols, :dim]


# ---------------------------- parameters ----------------------------

def _linear_params(key, fan_in, fan_out):
    kw, kb = jax.random.split(key)
    bound = 1.0 / np.sqrt(fan_in)
    w = jax.random.uniform(kw, (fan_in, fan_out), jnp.float32, -bound, bound)
    b = jax.random.uniform(kb, (1, fan_out), jnp.float32, -bound, bound)
    return w, b


def init_params(key, dim, agg_depth):
    keys = jax.random.split(key, 4 + 2 * agg_depth)
    params = {}
    params['W_i'] = _linear_params(keys[0], ATOM_FDIM, dim)
    params['W_o'] = _linear_params(keys[1], 2 * dim, dim)
    # NOTE: in the PyTorch module every W_h{i} wraps the *same* module list, so all
    # message-passing depths share one set of weights -> single shared list here.
    wh = [_linear_params(keys[2], dim + BOND_FDIM, dim)]
    for d in range(agg_depth):
        wh.append(_linear_params(keys[3 + d], dim, dim))
    params['W_h'] = wh
    off = 3 + agg_depth
    wah = [_linear_params(keys[off], ATOM_FDIM, dim)]
    for d in range(agg_depth):
        wah.append(_linear_params(keys[off + 1 + d], dim, dim))
    params['W_ah'] = wah
    return params


def pad_params(params, dim):
    """Pad weights to 128-lane bf16 slabs (once, at init) in the kernel's flat order."""
    bf16 = jnp.bfloat16
    AF_P = _round_up(ATOM_FDIM, LANE)
    BF_P = _round_up(BOND_FDIM, LANE)
    DP = _round_up(dim, LANE)

    def pad_w(w, r, c):
        return jnp.zeros((r, c), bf16).at[:w.shape[0], :w.shape[1]].set(w.astype(bf16))

    def pad_b(b, c):
        return jnp.zeros((1, c), jnp.float32).at[:, :b.shape[1]].set(b)

    flat = []
    wi, bi = params['W_i']
    flat += [pad_w(wi, AF_P, DP), pad_b(bi, DP)]
    wh0, bh0 = params['W_h'][0]
    flat += [pad_w(wh0[:dim], DP, DP), pad_w(wh0[dim:], BF_P, DP), pad_b(bh0, DP)]
    for (w, b) in params['W_h'][1:]:
        flat += [pad_w(w, DP, DP), pad_b(b, DP)]
    wah0, bah0 = params['W_ah'][0]
    flat += [pad_w(wah0, AF_P, DP), pad_b(bah0, DP)]
    for (w, b) in params['W_ah'][1:]:
        flat += [pad_w(w, DP, DP), pad_b(b, DP)]
    wo, bo = params['W_o']
    flat += [pad_w(wo[:dim], DP, DP), pad_w(wo[dim:], DP, DP), pad_b(bo, DP)]
    return flat


# ---------------------------- pure-JAX f32 reference ----------------------------

def reference_forward(params, f_atoms, f_bonds, a2a, a2b, scope, conv_num, agg_depth):
    hi = jax.lax.Precision.HIGHEST

    def lin(x, w, b):
        return jnp.dot(x, w, precision=hi) + b

    x = jax.nn.relu(lin(f_atoms, *params['W_i']))
    x = x.at[0].set(0.0)
    self_message = x
    message = x
    for _ in range(conv_num):
        nei_a = jnp.take(message, a2a, axis=0)
        nei_b = jnp.take(f_bonds, a2b, axis=0)
        nei = jnp.concatenate([nei_a, nei_b], axis=2).sum(axis=1)
        h = nei
        for (w, b) in params['W_h']:
            h = lin(jax.nn.relu(h), w, b)
        message = self_message + h
        self_message = message
        message = message.at[0].set(0.0)
    a_sum = jnp.take(message, a2a, axis=0).sum(axis=1)
    cc = f_atoms
    for (w, b) in params['W_ah']:
        cc = jax.nn.relu(lin(cc, w, b))
    out = jax.nn.relu(lin(jnp.concatenate([cc, a_sum], axis=1), *params['W_o']))
    mols = []
    for (s, n) in np.asarray(scope):
        mols.append(out[int(s):int(s) + int(n)].sum(axis=0))
    return jnp.stack(mols, axis=0)


# ---------------------------- main ----------------------------

if __name__ == "__main__":
    key = jax.random.PRNGKey(0)
    k_atoms, k_bonds, k_a2a, k_a2b, k_params = jax.random.split(key, 5)

    # small shapes; na=24 -> two 16-row tiles, so the multi-tile grid path is exercised
    num_atoms, num_bonds, max_nb = 24, 32, 4
    dim, conv_num, agg_depth = 32, 3, 1           # args: dim=32, ConvNum=3, agg_depth=1
    num_mols = 2

    f_atoms = jax.random.normal(k_atoms, (num_atoms, ATOM_FDIM), jnp.float32)
    f_atoms = f_atoms.at[0].set(0.0)              # index-0 padding atom
    f_bonds = jax.random.normal(k_bonds, (num_bonds, BOND_FDIM), jnp.float32)
    f_bonds = f_bonds.at[0].set(0.0)              # index-0 padding bond
    a2a = jax.random.randint(k_a2a, (num_atoms, max_nb), 0, num_atoms, jnp.int32)
    a2b = jax.random.randint(k_a2b, (num_atoms, max_nb), 0, num_bonds, jnp.int32)
    a2a = a2a.at[0].set(0)
    a2b = a2b.at[0].set(0)
    scope = jnp.array([[1, 11], [12, 12]], jnp.int32)   # a_scope: (a_start, a_size)

    params = init_params(k_params, dim, agg_depth)
    kparams = pad_params(params, dim)

    fwd = jax.jit(mpn_encoder_forward,
                  static_argnames=("conv_num", "agg_depth", "num_mols", "dim"))
    out = fwd(kparams, f_atoms, f_bonds, a2a, a2b, scope,
              conv_num=conv_num, agg_depth=agg_depth, num_mols=num_mols, dim=dim)
    out = jax.block_until_ready(out)

    ref = reference_forward(params, f_atoms, f_bonds, a2a, a2b, scope, conv_num, agg_depth)
    # bf16 weight-matmul operands with f32 accumulation vs. f32-HIGHEST reference.
    np.testing.assert_allclose(np.asarray(out), np.asarray(ref), rtol=5e-2, atol=1.5e-1)

    print("KERNEL_OK")
</pallas_src>

<mosaic_0001>
module attributes {stable_mosaic.version = 11 : i64} {
  func.func @kernel(%arg0: i32, %arg1: i32, %arg2: memref<16x128xbf16, #tpu.memory_space<vmem>>, %arg3: memref<32x128xbf16, #tpu.memory_space<vmem>>, %arg4: memref<16x32xbf16, #tpu.memory_space<vmem>>, %arg5: memref<16x32xbf16, #tpu.memory_space<vmem>>, %arg6: memref<16x8xf32, #tpu.memory_space<vmem>>, %arg7: memref<128x128xbf16, #tpu.memory_space<vmem>>, %arg8: memref<1x128xf32, #tpu.memory_space<vmem>>, %arg9: memref<128x128xbf16, #tpu.memory_space<vmem>>, %arg10: memref<128x128xbf16, #tpu.memory_space<vmem>>, %arg11: memref<1x128xf32, #tpu.memory_space<vmem>>, %arg12: memref<128x128xbf16, #tpu.memory_space<vmem>>, %arg13: memref<1x128xf32, #tpu.memory_space<vmem>>, %arg14: memref<128x128xbf16, #tpu.memory_space<vmem>>, %arg15: memref<1x128xf32, #tpu.memory_space<vmem>>, %arg16: memref<128x128xbf16, #tpu.memory_space<vmem>>, %arg17: memref<1x128xf32, #tpu.memory_space<vmem>>, %arg18: memref<128x128xbf16, #tpu.memory_space<vmem>>, %arg19: memref<128x128xbf16, #tpu.memory_space<vmem>>, %arg20: memref<1x128xf32, #tpu.memory_space<vmem>>, %arg21: memref<8x128xf32, #tpu.memory_space<vmem>>, %arg22: memref<32x128xf32, #tpu.memory_space<vmem>>, %arg23: memref<32x128xf32, #tpu.memory_space<vmem>>, %arg24: memref<32x128xf32, #tpu.memory_space<vmem>>) attributes {dimension_semantics = [#tpu.dimension_semantics<arbitrary>, #tpu.dimension_semantics<arbitrary>], iteration_bounds = array<i64: 5, 2>, scalar_prefetch = 0 : i64, scratch_operands = 3 : i64, tpu.core_type = #tpu.core_type<tc>, window_params = [{transform_indices = @transform_0, window_bounds = array<i64: 16, 128>}, {pipeline_mode = #tpu.pipeline_mode<synchronous>, transform_indices = @transform_1, window_bounds = array<i64: 32, 128>}, {transform_indices = @transform_2, window_bounds = array<i64: 16, 32>}, {transform_indices = @transform_3, window_bounds = array<i64: 16, 32>}, {transform_indices = @transform_4, window_bounds = array<i64: 16, 8>}, {pipeline_mode = #tpu.pipeline_mode<synchronous>, transform_indices = @transform_5, window_bounds = array<i64: 128, 128>}, {pipeline_mode = #tpu.pipeline_mode<synchronous>, transform_indices = @transform_6, window_bounds = array<i64: 1, 128>}, {pipeline_mode = #tpu.pipeline_mode<synchronous>, transform_indices = @transform_7, window_bounds = array<i64: 128, 128>}, {pipeline_mode = #tpu.pipeline_mode<synchronous>, transform_indices = @transform_8, window_bounds = array<i64: 128, 128>}, {pipeline_mode = #tpu.pipeline_mode<synchronous>, transform_indices = @transform_9, window_bounds = array<i64: 1, 128>}, {pipeline_mode = #tpu.pipeline_mode<synchronous>, transform_indices = @transform_10, window_bounds = array<i64: 128, 128>}, {pipeline_mode = #tpu.pipeline_mode<synchronous>, transform_indices = @transform_11, window_bounds = array<i64: 1, 128>}, {pipeline_mode = #tpu.pipeline_mode<synchronous>, transform_indices = @transform_12, window_bounds = array<i64: 128, 128>}, {pipeline_mode = #tpu.pipeline_mode<synchronous>, transform_indices = @transform_13, window_bounds = array<i64: 1, 128>}, {pipeline_mode = #tpu.pipeline_mode<synchronous>, transform_indices = @transform_14, window_bounds = array<i64: 128, 128>}, {pipeline_mode = #tpu.pipeline_mode<synchronous>, transform_indices = @transform_15, window_bounds = array<i64: 1, 128>}, {pipeline_mode = #tpu.pipeline_mode<synchronous>, transform_indices = @transform_16, window_bounds = array<i64: 128, 128>}, {pipeline_mode = #tpu.pipeline_mode<synchronous>, transform_indices = @transform_17, window_bounds = array<i64: 128, 128>}, {pipeline_mode = #tpu.pipeline_mode<synchronous>, transform_indices = @transform_18, window_bounds = array<i64: 1, 128>}, {pipeline_mode = #tpu.pipeline_mode<synchronous>, transform_indices = @transform_19, window_bounds = array<i64: 8, 128>}]} {
    %c16_i32 = arith.constant 16 : i32
    %0 = arith.muli %arg1, %c16_i32 : i32
    %1 = tpu.assume_multiple %0, 16 : i32
    %2 = tpu.iota {dimensions = array<i32: 0>} : vector<16x1xi32>
    %3 = vector.broadcast %1 : i32 to vector<16x1xi32>
    %4 = arith.addi %2, %3 : vector<16x1xi32>
    %c0_i32 = arith.constant 0 : i32
    %5 = vector.broadcast %c0_i32 : i32 to vector<16x1xi32>
    %6 = arith.cmpi ne, %4, %5 : vector<16x1xi32>
    %7 = arith.extui %6 : vector<16x1xi1> to vector<16x1xi32>
    %8 = arith.sitofp %7 : vector<16x1xi32> to vector<16x1xf32>
    %c0_i32_0 = arith.constant 0 : i32
    %9 = arith.cmpi eq, %arg0, %c0_i32_0 : i32
    %c0_i32_1 = arith.constant 0 : i32
    %10 = arith.cmpi eq, %arg1, %c0_i32_1 : i32
    %11 = arith.andi %9, %10 : i1
    %12 = arith.extui %11 : i1 to i32
    %c0_i32_2 = arith.constant 0 : i32
    %13 = arith.cmpi ne, %12, %c0_i32_2 : i32
    scf.if %13 {
      %cst = arith.constant 0.000000e+00 : f32
      %51 = vector.broadcast %cst : f32 to vector<8x128xf32>
      %c0 = arith.constant 0 : index
      %c0_21 = arith.constant 0 : index
      %52 = vector.load %arg21[%c0, %c0_21] : memref<8x128xf32, #tpu.memory_space<vmem>>, vector<8x128xf32>
      tpu.vector_store %arg21[%c0, %c0_21], %51 {strides = array<i32>} : memref<8x128xf32, #tpu.memory_space<vmem>>, vector<8x128xf32>,
    } else {
    }
    %c0_i32_3 = arith.constant 0 : i32
    %14 = arith.cmpi eq, %arg0, %c0_i32_3 : i32
    %15 = arith.extui %14 : i1 to i32
    %c0_i32_4 = arith.constant 0 : i32
    %16 = arith.cmpi ne, %15, %c0_i32_4 : i32
    scf.if %16 {
      %c0 = arith.constant 0 : index
      %c0_21 = arith.constant 0 : index
      %51 = vector.load %arg2[%c0, %c0_21] : memref<16x128xbf16, #tpu.memory_space<vmem>>, vector<16x128xbf16>
      %c0_22 = arith.constant 0 : index
      %c0_23 = arith.constant 0 : index
      %52 = vector.load %arg7[%c0_22, %c0_23] : memref<128x128xbf16, #tpu.memory_space<vmem>>, vector<128x128xbf16>
      %cst = arith.constant dense<0.000000e+00> : vector<16x128xf32>
      %53 = tpu.matmul %51, %52, %cst {dimension_numbers = #tpu.dot_dimension_numbers<[1], [0], [0], [1], [0, 0, 1, 1], [], []>} : vector<16x128xbf16>, vector<128x128xbf16>, vector<16x128xf32> -> vector<16x128xf32>
      %c0_24 = arith.constant 0 : index
      %c0_25 = arith.constant 0 : index
      %54 = vector.load %arg8[%c0_24, %c0_25] : memref<1x128xf32, #tpu.memory_space<vmem>>, vector<1x128xf32>
      %55 = vector.broadcast %54 : vector<1x128xf32> to vector<16x128xf32>
      %56 = arith.addf %53, %55 : vector<16x128xf32>
      %cst_26 = arith.constant 0.000000e+00 : f32
      %57 = vector.broadcast %cst_26 : f32 to vector<16x128xf32>
      %58 = arith.maximumf %56, %57 : vector<16x128xf32>
      %59 = vector.broadcast %8 : vector<16x1xf32> to vector<16x128xf32>
      %60 = arith.mulf %58, %59 : vector<16x128xf32>
      %61 = arith.index_cast %1 : i32 to index
      %c0_27 = arith.constant 0 : index
      %62 = vector.load %arg22[%61, %c0_27] : memref<32x128xf32, #tpu.memory_space<vmem>>, vector<16x128xf32>
      tpu.vector_store %arg22[%61, %c0_27], %60 {strides = array<i32>} : memref<32x128xf32, #tpu.memory_space<vmem>>, vector<16x128xf32>,
      %c0_28 = arith.constant 0 : index
      %c0_29 = arith.constant 0 : index
      %63 = vector.load %arg5[%c0_28, %c0_29] : memref<16x32xbf16, #tpu.memory_space<vmem>>, vector<16x32xbf16>
      %c0_30 = arith.constant 0 : index
      %c0_31 = arith.constant 0 : index
      %64 = vector.load %arg3[%c0_30, %c0_31] : memref<32x128xbf16, #tpu.memory_space<vmem>>, vector<32x128xbf16>
      %cst_32 = arith.constant dense<0.000000e+00> : vector<16x128xf32>
      %65 = tpu.matmul %63, %64, %cst_32 {dimension_numbers = #tpu.dot_dimension_numbers<[1], [0], [0], [1], [0, 0, 1, 1], [], []>} : vector<16x32xbf16>, vector<32x128xbf16>, vector<16x128xf32> -> vector<16x128xf32>
      %cst_33 = arith.constant 0.000000e+00 : f32
      %66 = vector.broadcast %cst_33 : f32 to vector<16x128xf32>
      %67 = arith.maximumf %65, %66 : vector<16x128xf32>
      %68 = arith.truncf %67 : vector<16x128xf32> to vector<16x128xbf16>
      %c0_34 = arith.constant 0 : index
      %c0_35 = arith.constant 0 : index
      %69 = vector.load %arg10[%c0_34, %c0_35] : memref<128x128xbf16, #tpu.memory_space<vmem>>, vector<128x128xbf16>
      %cst_36 = arith.constant dense<0.000000e+00> : vector<16x128xf32>
      %70 = tpu.matmul %68, %69, %cst_36 {dimension_numbers = #tpu.dot_dimension_numbers<[1], [0], [0], [1], [0, 0, 1, 1], [], []>} : vector<16x128xbf16>, vector<128x128xbf16>, vector<16x128xf32> -> vector<16x128xf32>
      %c0_37 = arith.constant 0 : index
      %c0_38 = arith.constant 0 : index
      %71 = vector.load %arg11[%c0_37, %c0_38] : memref<1x128xf32, #tpu.memory_space<vmem>>, vector<1x128xf32>
      %72 = vector.broadcast %71 : vector<1x128xf32> to vector<16x128xf32>
      %73 = arith.addf %70, %72 : vector<16x128xf32>
      %74 = arith.index_cast %1 : i32 to index
      %c0_39 = arith.constant 0 : index
      %75 = vector.load %arg24[%74, %c0_39] : memref<32x128xf32, #tpu.memory_space<vmem>>, vector<16x128xf32>
      tpu.vector_store %arg24[%74, %c0_39], %73 {strides = array<i32>} : memref<32x128xf32, #tpu.memory_space<vmem>>, vector<16x128xf32>,
    } else {
    }
    %c1_i32 = arith.constant 1 : i32
    %17 = arith.cmpi sge, %arg0, %c1_i32 : i32
    %c3_i32 = arith.constant 3 : i32
    %18 = arith.cmpi sle, %arg0, %c3_i32 : i32
    %19 = arith.andi %17, %18 : i1
    %c2_i32 = arith.constant 2 : i32
    %c0_i32_5 = arith.constant 0 : i32
    %20 = arith.cmpi eq, %c2_i32, %c0_i32_5 : i32
    %c1_i32_6 = arith.constant 1 : i32
    %21 = arith.select %20, %c1_i32_6, %c2_i32 : i32
    %22 = arith.remsi %arg0, %21 : i32
    %c0_i32_7 = arith.constant 0 : i32
    %23 = arith.cmpi ne, %22, %c0_i32_7 : i32
    %c0_i32_8 = arith.constant 0 : i32
    %24 = arith.cmpi slt, %22, %c0_i32_8 : i32
    %c0_i32_9 = arith.constant 0 : i32
    %25 = arith.cmpi slt, %21, %c0_i32_9 : i32
    %26 = arith.xori %24, %25 : i1
    %27 = arith.andi %26, %23 : i1
    %28 = arith.addi %22, %21 : i32
    %29 = arith.select %27, %28, %22 : i32
    %c1_i32_10 = arith.constant 1 : i32
    %30 = arith.cmpi eq, %29, %c1_i32_10 : i32
    %31 = arith.andi %19, %30 : i1
    %32 = arith.extui %31 : i1 to i32
    %c0_i32_11 = arith.constant 0 : i32
    %33 = arith.cmpi ne, %32, %c0_i32_11 : i32
    scf.if %33 {
      %c0 = arith.constant 0 : index
      %c0_21 = arith.constant 0 : index
      %51 = vector.load %arg4[%c0, %c0_21] : memref<16x32xbf16, #tpu.memory_space<vmem>>, vector<16x32xbf16>
      %52 = arith.extf %51 : vector<16x32xbf16> to vector<16x32xf32>
      %c0_22 = arith.constant 0 : index
      %c0_23 = arith.constant 0 : index
      %53 = vector.load %arg22[%c0_22, %c0_23] : memref<32x128xf32, #tpu.memory_space<vmem>>, vector<32x128xf32>
      %cst = arith.constant dense<0.000000e+00> : vector<16x128xf32>
      %54 = tpu.matmul %52, %53, %cst {dimension_numbers = #tpu.dot_dimension_numbers<[1], [0], [0], [1], [0, 0, 1, 1], [], []>} : vector<16x32xf32>, vector<32x128xf32>, vector<16x128xf32> -> vector<16x128xf32>
      %cst_24 = arith.constant 0.000000e+00 : f32
      %55 = vector.broadcast %cst_24 : f32 to vector<16x128xf32>
      %56 = arith.maximumf %54, %55 : vector<16x128xf32>
      %57 = arith.truncf %56 : vector<16x128xf32> to vector<16x128xbf16>
      %c0_25 = arith.constant 0 : index
      %c0_26 = arith.constant 0 : index
      %58 = vector.load %arg9[%c0_25, %c0_26] : memref<128x128xbf16, #tpu.memory_space<vmem>>, vector<128x128xbf16>
      %cst_27 = arith.constant dense<0.000000e+00> : vector<16x128xf32>
      %59 = tpu.matmul %57, %58, %cst_27 {dimension_numbers = #tpu.dot_dimension_numbers<[1], [0], [0], [1], [0, 0, 1, 1], [], []>} : vector<16x128xbf16>, vector<128x128xbf16>, vector<16x128xf32> -> vector<16x128xf32>
      %60 = arith.index_cast %1 : i32 to index
      %c0_28 = arith.constant 0 : index
      %61 = vector.load %arg24[%60, %c0_28] : memref<32x128xf32, #tpu.memory_space<vmem>>, vector<16x128xf32>
      %62 = arith.addf %59, %61 : vector<16x128xf32>
      %cst_29 = arith.constant 0.000000e+00 : f32
      %63 = vector.broadcast %cst_29 : f32 to vector<16x128xf32>
      %64 = arith.maximumf %62, %63 : vector<16x128xf32>
      %65 = arith.truncf %64 : vector<16x128xf32> to vector<16x128xbf16>
      %c0_30 = arith.constant 0 : index
      %c0_31 = arith.constant 0 : index
      %66 = vector.load %arg12[%c0_30, %c0_31] : memref<128x128xbf16, #tpu.memory_space<vmem>>, vector<128x128xbf16>
      %cst_32 = arith.constant dense<0.000000e+00> : vector<16x128xf32>
      %67 = tpu.matmul %65, %66, %cst_32 {dimension_numbers = #tpu.dot_dimension_numbers<[1], [0], [0], [1], [0, 0, 1, 1], [], []>} : vector<16x128xbf16>, vector<128x128xbf16>, vector<16x128xf32> -> vector<16x128xf32>
      %c0_33 = arith.constant 0 : index
      %c0_34 = arith.constant 0 : index
      %68 = vector.load %arg13[%c0_33, %c0_34] : memref<1x128xf32, #tpu.memory_space<vmem>>, vector<1x128xf32>
      %69 = vector.broadcast %68 : vector<1x128xf32> to vector<16x128xf32>
      %70 = arith.addf %67, %69 : vector<16x128xf32>
      %71 = arith.index_cast %1 : i32 to index
      %c0_35 = arith.constant 0 : index
      %72 = vector.load %arg22[%71, %c0_35] : memref<32x128xf32, #tpu.memory_space<vmem>>, vector<16x128xf32>
      %73 = arith.addf %72, %70 : vector<16x128xf32>
      %74 = vector.broadcast %8 : vector<16x1xf32> to vector<16x128xf32>
      %75 = arith.mulf %73, %74 : vector<16x128xf32>
      %76 = arith.index_cast %1 : i32 to index
      %c0_36 = arith.constant 0 : index
      %77 = vector.load %arg23[%76, %c0_36] : memref<32x128xf32, #tpu.memory_space<vmem>>, vector<16x128xf32>
      tpu.vector_store %arg23[%76, %c0_36], %75 {strides = array<i32>} : memref<32x128xf32, #tpu.memory_space<vmem>>, vector<16x128xf32>,
    } else {
    }
    %c2_i32_12 = arith.constant 2 : i32
    %c0_i32_13 = arith.constant 0 : i32
    %34 = arith.cmpi eq, %c2_i32_12, %c0_i32_13 : i32
    %c1_i32_14 = arith.constant 1 : i32
    %35 = arith.select %34, %c1_i32_14, %c2_i32_12 : i32
    %36 = arith.remsi %arg0, %35 : i32
    %c0_i32_15 = arith.constant 0 : i32
    %37 = arith.cmpi ne, %36, %c0_i32_15 : i32
    %c0_i32_16 = arith.constant 0 : i32
    %38 = arith.cmpi slt, %36, %c0_i32_16 : i32
    %c0_i32_17 = arith.constant 0 : i32
    %39 = arith.cmpi slt, %35, %c0_i32_17 : i32
    %40 = arith.xori %38, %39 : i1
    %41 = arith.andi %40, %37 : i1
    %42 = arith.addi %36, %35 : i32
    %43 = arith.select %41, %42, %36 : i32
    %c0_i32_18 = arith.constant 0 : i32
    %44 = arith.cmpi eq, %43, %c0_i32_18 : i32
    %45 = arith.andi %19, %44 : i1
    %46 = arith.extui %45 : i1 to i32
    %c0_i32_19 = arith.constant 0 : i32
    %47 = arith.cmpi ne, %46, %c0_i32_19 : i32
    scf.if %47 {
      %c0 = arith.constant 0 : index
      %c0_21 = arith.constant 0 : index
      %51 = vector.load %arg4[%c0, %c0_21] : memref<16x32xbf16, #tpu.memory_space<vmem>>, vector<16x32xbf16>
      %52 = arith.extf %51 : vector<16x32xbf16> to vector<16x32xf32>
      %c0_22 = arith.constant 0 : index
      %c0_23 = arith.constant 0 : index
      %53 = vector.load %arg23[%c0_22, %c0_23] : memref<32x128xf32, #tpu.memory_space<vmem>>, vector<32x128xf32>
      %cst = arith.constant dense<0.000000e+00> : vector<16x128xf32>
      %54 = tpu.matmul %52, %53, %cst {dimension_numbers = #tpu.dot_dimension_numbers<[1], [0], [0], [1], [0, 0, 1, 1], [], []>} : vector<16x32xf32>, vector<32x128xf32>, vector<16x128xf32> -> vector<16x128xf32>
      %cst_24 = arith.constant 0.000000e+00 : f32
      %55 = vector.broadcast %cst_24 : f32 to vector<16x128xf32>
      %56 = arith.maximumf %54, %55 : vector<16x128xf32>
      %57 = arith.truncf %56 : vector<16x128xf32> to vector<16x128xbf16>
      %c0_25 = arith.constant 0 : index
      %c0_26 = arith.constant 0 : index
      %58 = vector.load %arg9[%c0_25, %c0_26] : memref<128x128xbf16, #tpu.memory_space<vmem>>, vector<128x128xbf16>
      %cst_27 = arith.constant dense<0.000000e+00> : vector<16x128xf32>
      %59 = tpu.matmul %57, %58, %cst_27 {dimension_numbers = #tpu.dot_dimension_numbers<[1], [0], [0], [1], [0, 0, 1, 1], [], []>} : vector<16x128xbf16>, vector<128x128xbf16>, vector<16x128xf32> -> vector<16x128xf32>
      %60 = arith.index_cast %1 : i32 to index
      %c0_28 = arith.constant 0 : index
      %61 = vector.load %arg24[%60, %c0_28] : memref<32x128xf32, #tpu.memory_space<vmem>>, vector<16x128xf32>
      %62 = arith.addf %59, %61 : vector<16x128xf32>
      %cst_29 = arith.constant 0.000000e+00 : f32
      %63 = vector.broadcast %cst_29 : f32 to vector<16x128xf32>
      %64 = arith.maximumf %62, %63 : vector<16x128xf32>
      %65 = arith.truncf %64 : vector<16x128xf32> to vector<16x128xbf16>
      %c0_30 = arith.constant 0 : index
      %c0_31 = arith.constant 0 : index
      %66 = vector.load %arg12[%c0_30, %c0_31] : memref<128x128xbf16, #tpu.memory_space<vmem>>, vector<128x128xbf16>
      %cst_32 = arith.constant dense<0.000000e+00> : vector<16x128xf32>
      %67 = tpu.matmul %65, %66, %cst_32 {dimension_numbers = #tpu.dot_dimension_numbers<[1], [0], [0], [1], [0, 0, 1, 1], [], []>} : vector<16x128xbf16>, vector<128x128xbf16>, vector<16x128xf32> -> vector<16x128xf32>
      %c0_33 = arith.constant 0 : index
      %c0_34 = arith.constant 0 : index
      %68 = vector.load %arg13[%c0_33, %c0_34] : memref<1x128xf32, #tpu.memory_space<vmem>>, vector<1x128xf32>
      %69 = vector.broadcast %68 : vector<1x128xf32> to vector<16x128xf32>
      %70 = arith.addf %67, %69 : vector<16x128xf32>
      %71 = arith.index_cast %1 : i32 to index
      %c0_35 = arith.constant 0 : index
      %72 = vector.load %arg23[%71, %c0_35] : memref<32x128xf32, #tpu.memory_space<vmem>>, vector<16x128xf32>
      %73 = arith.addf %72, %70 : vector<16x128xf32>
      %74 = vector.broadcast %8 : vector<16x1xf32> to vector<16x128xf32>
      %75 = arith.mulf %73, %74 : vector<16x128xf32>
      %76 = arith.index_cast %1 : i32 to index
      %c0_36 = arith.constant 0 : index
      %77 = vector.load %arg22[%76, %c0_36] : memref<32x128xf32, #tpu.memory_space<vmem>>, vector<16x128xf32>
      tpu.vector_store %arg22[%76, %c0_36], %75 {strides = array<i32>} : memref<32x128xf32, #tpu.memory_space<vmem>>, vector<16x128xf32>,
    } else {
    }
    %c4_i32 = arith.constant 4 : i32
    %48 = arith.cmpi eq, %arg0, %c4_i32 : i32
    %49 = arith.extui %48 : i1 to i32
    %c0_i32_20 = arith.constant 0 : i32
    %50 = arith.cmpi ne, %49, %c0_i32_20 : i32
    scf.if %50 {
      %c0 = arith.constant 0 : index
      %c0_21 = arith.constant 0 : index
      %51 = vector.load %arg4[%c0, %c0_21] : memref<16x32xbf16, #tpu.memory_space<vmem>>, vector<16x32xbf16>
      %52 = arith.extf %51 : vector<16x32xbf16> to vector<16x32xf32>
      %c0_22 = arith.constant 0 : index
      %c0_23 = arith.constant 0 : index
      %53 = vector.load %arg23[%c0_22, %c0_23] : memref<32x128xf32, #tpu.memory_space<vmem>>, vector<32x128xf32>
      %cst = arith.constant dense<0.000000e+00> : vector<16x128xf32>
      %54 = tpu.matmul %52, %53, %cst {dimension_numbers = #tpu.dot_dimension_numbers<[1], [0], [0], [1], [0, 0, 1, 1], [], []>} : vector<16x32xf32>, vector<32x128xf32>, vector<16x128xf32> -> vector<16x128xf32>
      %c0_24 = arith.constant 0 : index
      %c0_25 = arith.constant 0 : index
      %55 = vector.load %arg2[%c0_24, %c0_25] : memref<16x128xbf16, #tpu.memory_space<vmem>>, vector<16x128xbf16>
      %c0_26 = arith.constant 0 : index
      %c0_27 = arith.constant 0 : index
      %56 = vector.load %arg14[%c0_26, %c0_27] : memref<128x128xbf16, #tpu.memory_space<vmem>>, vector<128x128xbf16>
      %cst_28 = arith.constant dense<0.000000e+00> : vector<16x128xf32>
      %57 = tpu.matmul %55, %56, %cst_28 {dimension_numbers = #tpu.dot_dimension_numbers<[1], [0], [0], [1], [0, 0, 1, 1], [], []>} : vector<16x128xbf16>, vector<128x128xbf16>, vector<16x128xf32> -> vector<16x128xf32>
      %c0_29 = arith.constant 0 : index
      %c0_30 = arith.constant 0 : index
      %58 = vector.load %arg15[%c0_29, %c0_30] : memref<1x128xf32, #tpu.memory_space<vmem>>, vector<1x128xf32>
      %59 = vector.broadcast %58 : vector<1x128xf32> to vector<16x128xf32>
      %60 = arith.addf %57, %59 : vector<16x128xf32>
      %cst_31 = arith.constant 0.000000e+00 : f32
      %61 = vector.broadcast %cst_31 : f32 to vector<16x128xf32>
      %62 = arith.maximumf %60, %61 : vector<16x128xf32>
      %63 = arith.truncf %62 : vector<16x128xf32> to vector<16x128xbf16>
      %c0_32 = arith.constant 0 : index
      %c0_33 = arith.constant 0 : index
      %64 = vector.load %arg16[%c0_32, %c0_33] : memref<128x128xbf16, #tpu.memory_space<vmem>>, vector<128x128xbf16>
      %cst_34 = arith.constant dense<0.000000e+00> : vector<16x128xf32>
      %65 = tpu.matmul %63, %64, %cst_34 {dimension_numbers = #tpu.dot_dimension_numbers<[1], [0], [0], [1], [0, 0, 1, 1], [], []>} : vector<16x128xbf16>, vector<128x128xbf16>, vector<16x128xf32> -> vector<16x128xf32>
      %c0_35 = arith.constant 0 : index
      %c0_36 = arith.constant 0 : index
      %66 = vector.load %arg17[%c0_35, %c0_36] : memref<1x128xf32, #tpu.memory_space<vmem>>, vector<1x128xf32>
      %67 = vector.broadcast %66 : vector<1x128xf32> to vector<16x128xf32>
      %68 = arith.addf %65, %67 : vector<16x128xf32>
      %cst_37 = arith.constant 0.000000e+00 : f32
      %69 = vector.broadcast %cst_37 : f32 to vector<16x128xf32>
      %70 = arith.maximumf %68, %69 : vector<16x128xf32>
      %71 = arith.truncf %70 : vector<16x128xf32> to vector<16x128xbf16>
      %c0_38 = arith.constant 0 : index
      %c0_39 = arith.constant 0 : index
      %72 = vector.load %arg18[%c0_38, %c0_39] : memref<128x128xbf16, #tpu.memory_space<vmem>>, vector<128x128xbf16>
      %cst_40 = arith.constant dense<0.000000e+00> : vector<16x128xf32>
      %73 = tpu.matmul %71, %72, %cst_40 {dimension_numbers = #tpu.dot_dimension_numbers<[1], [0], [0], [1], [0, 0, 1, 1], [], []>} : vector<16x128xbf16>, vector<128x128xbf16>, vector<16x128xf32> -> vector<16x128xf32>
      %74 = arith.truncf %54 : vector<16x128xf32> to vector<16x128xbf16>
      %c0_41 = arith.constant 0 : index
      %c0_42 = arith.constant 0 : index
      %75 = vector.load %arg19[%c0_41, %c0_42] : memref<128x128xbf16, #tpu.memory_space<vmem>>, vector<128x128xbf16>
      %cst_43 = arith.constant dense<0.000000e+00> : vector<16x128xf32>
      %76 = tpu.matmul %74, %75, %cst_43 {dimension_numbers = #tpu.dot_dimension_numbers<[1], [0], [0], [1], [0, 0, 1, 1], [], []>} : vector<16x128xbf16>, vector<128x128xbf16>, vector<16x128xf32> -> vector<16x128xf32>
      %77 = arith.addf %73, %76 : vector<16x128xf32>
      %c0_44 = arith.constant 0 : index
      %c0_45 = arith.constant 0 : index
      %78 = vector.load %arg20[%c0_44, %c0_45] : memref<1x128xf32, #tpu.memory_space<vmem>>, vector<1x128xf32>
      %79 = vector.broadcast %78 : vector<1x128xf32> to vector<16x128xf32>
      %80 = arith.addf %77, %79 : vector<16x128xf32>
      %cst_46 = arith.constant 0.000000e+00 : f32
      %81 = vector.broadcast %cst_46 : f32 to vector<16x128xf32>
      %82 = arith.maximumf %80, %81 : vector<16x128xf32>
      %c0_47 = arith.constant 0 : index
      %c0_48 = arith.constant 0 : index
      %83 = vector.load %arg21[%c0_47, %c0_48] : memref<8x128xf32, #tpu.memory_space<vmem>>, vector<8x128xf32>
      %c0_49 = arith.constant 0 : index
      %c0_50 = arith.constant 0 : index
      %84 = vector.load %arg6[%c0_49, %c0_50] : memref<16x8xf32, #tpu.memory_space<vmem>>, vector<16x8xf32>
      "tpu.trace_start"() <{level = 10 : i32, message = "am,ad->md"}> : () -> ()
      %cst_51 = arith.constant dense<0.000000e+00> : vector<8x128xf32>
      %85 = tpu.matmul %84, %82, %cst_51 {dimension_numbers = #tpu.dot_dimension_numbers<[0], [0], [1], [1], [0, 1, 1, 1], [], []>} : vector<16x8xf32>, vector<16x128xf32>, vector<8x128xf32> -> vector<8x128xf32>
      "tpu.trace_stop"() : () -> ()
      %86 = arith.addf %83, %85 : vector<8x128xf32>
      %c0_52 = arith.constant 0 : index
      %c0_53 = arith.constant 0 : index
      %87 = vector.load %arg21[%c0_52, %c0_53] : memref<8x128xf32, #tpu.memory_space<vmem>>, vector<8x128xf32>
      tpu.vector_store %arg21[%c0_52, %c0_53], %86 {strides = array<i32>} : memref<8x128xf32, #tpu.memory_space<vmem>>, vector<8x128xf32>,
    } else {
    }
    return
  }
  func.func @transform_0(%arg0: i32, %arg1: i32) -> (i32, i32) {
    %c0_i32 = arith.constant 0 : i32
    %c0_i32_0 = arith.constant 0 : i32
    return %arg1, %c0_i32 : i32, i32
  }
  func.func @transform_1(%arg0: i32, %arg1: i32) -> (i32, i32) {
    %c0_i32 = arith.constant 0 : i32
    %c0_i32_0 = arith.constant 0 : i32
    %c0_i32_1 = arith.constant 0 : i32
    return %c0_i32, %c0_i32_0 : i32, i32
  }
  func.func @transform_2(%arg0: i32, %arg1: i32) -> (i32, i32) {
    %c0_i32 = arith.constant 0 : i32
    %c0_i32_0 = arith.constant 0 : i32
    return %arg1, %c0_i32 : i32, i32
  }
  func.func @transform_3(%arg0: i32, %arg1: i32) -> (i32, i32) {
    %c0_i32 = arith.constant 0 : i32
    %c0_i32_0 = arith.constant 0 : i32
    return %arg1, %c0_i32 : i32, i32
  }
  func.func @transform_4(%arg0: i32, %arg1: i32) -> (i32, i32) {
    %c0_i32 = arith.constant 0 : i32
    %c0_i32_0 = arith.constant 0 : i32
    return %arg1, %c0_i32 : i32, i32
  }
  func.func @transform_5(%arg0: i32, %arg1: i32) -> (i32, i32) {
    %c0_i32 = arith.constant 0 : i32
    %c0_i32_0 = arith.constant 0 : i32
    %c0_i32_1 = arith.constant 0 : i32
    return %c0_i32, %c0_i32_0 : i32, i32
  }
  func.func @transform_6(%arg0: i32, %arg1: i32) -> (i32, i32) {
    %c0_i32 = arith.constant 0 : i32
    %c0_i32_0 = arith.constant 0 : i32
    %c0_i32_1 = arith.constant 0 : i32
    return %c0_i32, %c0_i32_0 : i32, i32
  }
  func.func @transform_7(%arg0: i32, %arg1: i32) -> (i32, i32) {
    %c0_i32 = arith.constant 0 : i32
    %c0_i32_0 = arith.constant 0 : i32
    %c0_i32_1 = arith.constant 0 : i32
    return %c0_i32, %c0_i32_0 : i32, i32
  }
  func.func @transform_8(%arg0: i32, %arg1: i32) -> (i32, i32) {
    %c0_i32 = arith.constant 0 : i32
    %c0_i32_0 = arith.constant 0 : i32
    %c0_i32_1 = arith.constant 0 : i32
    return %c0_i32, %c0_i32_0 : i32, i32
  }
  func.func @transform_9(%arg0: i32, %arg1: i32) -> (i32, i32) {
    %c0_i32 = arith.constant 0 : i32
    %c0_i32_0 = arith.constant 0 : i32
    %c0_i32_1 = arith.constant 0 : i32
    return %c0_i32, %c0_i32_0 : i32, i32
  }
  func.func @transform_10(%arg0: i32, %arg1: i32) -> (i32, i32) {
    %c0_i32 = arith.constant 0 : i32
    %c0_i32_0 = arith.constant 0 : i32
    %c0_i32_1 = arith.constant 0 : i32
    return %c0_i32, %c0_i32_0 : i32, i32
  }
  func.func @transform_11(%arg0: i32, %arg1: i32) -> (i32, i32) {
    %c0_i32 = arith.constant 0 : i32
    %c0_i32_0 = arith.constant 0 : i32
    %c0_i32_1 = arith.constant 0 : i32
    return %c0_i32, %c0_i32_0 : i32, i32
  }
  func.func @transform_12(%arg0: i32, %arg1: i32) -> (i32, i32) {
    %c0_i32 = arith.constant 0 : i32
    %c0_i32_0 = arith.constant 0 : i32
    %c0_i32_1 = arith.constant 0 : i32
    return %c0_i32, %c0_i32_0 : i32, i32
  }
  func.func @transform_13(%arg0: i32, %arg1: i32) -> (i32, i32) {
    %c0_i32 = arith.constant 0 : i32
    %c0_i32_0 = arith.constant 0 : i32
    %c0_i32_1 = arith.constant 0 : i32
    return %c0_i32, %c0_i32_0 : i32, i32
  }
  func.func @transform_14(%arg0: i32, %arg1: i32) -> (i32, i32) {
    %c0_i32 = arith.constant 0 : i32
    %c0_i32_0 = arith.constant 0 : i32
    %c0_i32_1 = arith.constant 0 : i32
    return %c0_i32, %c0_i32_0 : i32, i32
  }
  func.func @transform_15(%arg0: i32, %arg1: i32) -> (i32, i32) {
    %c0_i32 = arith.constant 0 : i32
    %c0_i32_0 = arith.constant 0 : i32
    %c0_i32_1 = arith.constant 0 : i32
    return %c0_i32, %c0_i32_0 : i32, i32
  }
  func.func @transform_16(%arg0: i32, %arg1: i32) -> (i32, i32) {
    %c0_i32 = arith.constant 0 : i32
    %c0_i32_0 = arith.constant 0 : i32
    %c0_i32_1 = arith.constant 0 : i32
    return %c0_i32, %c0_i32_0 : i32, i32
  }
  func.func @transform_17(%arg0: i32, %arg1: i32) -> (i32, i32) {
    %c0_i32 = arith.constant 0 : i32
    %c0_i32_0 = arith.constant 0 : i32
    %c0_i32_1 = arith.constant 0 : i32
    return %c0_i32, %c0_i32_0 : i32, i32
  }
  func.func @transform_18(%arg0: i32, %arg1: i32) -> (i32, i32) {
    %c0_i32 = arith.constant 0 : i32
    %c0_i32_0 = arith.constant 0 : i32
    %c0_i32_1 = arith.constant 0 : i32
    return %c0_i32, %c0_i32_0 : i32, i32
  }
  func.func @transform_19(%arg0: i32, %arg1: i32) -> (i32, i32) {
    %c0_i32 = arith.constant 0 : i32
    %c0_i32_0 = arith.constant 0 : i32
    %c0_i32_1 = arith.constant 0 : i32
    return %c0_i32, %c0_i32_0 : i32, i32
  }
}

</mosaic_0001>

<llo_original>
// kernel: mpn_encoder_forward.1
$region0: #{mpn_encoder_forward.1}
  #allocation0 [shape = 'u32[]', space=smem, size = 0x4, offset = 0x4, fixed_abs, tag = 'smem constant byte address 0x4 - core index']
  #allocation1 [shape = 'u32[144,128]{1,0:T(1,128)}', space=vmem, size = 0x12000, scoped, tag = 'internal scratch']
  #allocation2 [shape = 'f32[32,128]{1,0:T(8,128)}', space=vmem, size = 0x4000, scoped, tag = 'scratch operand']
  #allocation3 [shape = 'f32[32,128]{1,0:T(8,128)}', space=vmem, size = 0x4000, scoped, tag = 'scratch operand']
  #allocation4 [shape = 'f32[32,128]{1,0:T(8,128)}', space=vmem, size = 0x4000, scoped, tag = 'scratch operand']
  %s0 = inlined_call_operand.vmem [shape: bf16[32,128], index: 0, kind: input, shape index: {}]
  %s1 = inlined_call_operand.vmem [shape: bf16[32,128], index: 1, kind: input, shape index: {}]
  %s2 = inlined_call_operand.vmem [shape: bf16[32,32], index: 2, kind: input, shape index: {}]
  %s3 = inlined_call_operand.vmem [shape: bf16[32,32], index: 3, kind: input, shape index: {}]
  %s4 = inlined_call_operand.vmem [shape: f32[32,8], index: 4, kind: input, shape index: {}]
  %s5 = inlined_call_operand.vmem [shape: bf16[128,128], index: 5, kind: input, shape index: {}]
  %s6 = inlined_call_operand.hbm [shape: f32[1,128], index: 6, kind: input, shape index: {}]
  %s7 = inlined_call_operand.vmem [shape: bf16[128,128], index: 7, kind: input, shape index: {}]
  %s8 = inlined_call_operand.vmem [shape: bf16[128,128], index: 8, kind: input, shape index: {}]
  %s9 = inlined_call_operand.hbm [shape: f32[1,128], index: 9, kind: input, shape index: {}]
  %s10 = inlined_call_operand.vmem [shape: bf16[128,128], index: 10, kind: input, shape index: {}]
  %s11 = inlined_call_operand.hbm [shape: f32[1,128], index: 11, kind: input, shape index: {}]
  %s12 = inlined_call_operand.vmem [shape: bf16[128,128], index: 12, kind: input, shape index: {}]
  %s13 = inlined_call_operand.hbm [shape: f32[1,128], index: 13, kind: input, shape index: {}]
  %s14 = inlined_call_operand.hbm [shape: bf16[128,128], index: 14, kind: input, shape index: {}]
  %s15 = inlined_call_operand.hbm [shape: f32[1,128], index: 15, kind: input, shape index: {}]
  %s16 = inlined_call_operand.vmem [shape: bf16[128,128], index: 16, kind: input, shape index: {}]
  %s17 = inlined_call_operand.hbm [shape: bf16[128,128], index: 17, kind: input, shape index: {}]
  %s18 = inlined_call_operand.hbm [shape: f32[1,128], index: 18, kind: input, shape index: {}]
  %s19 = inlined_call_operand.vmem [shape: f32[8,128], index: 19, kind: output, shape index: {}]
  %s20 = sld [smem:[#allocation0]]
  $region161: #{mpn_encoder_forward.1} parent=0
    _
  %s22 = ssub.s32 1, %s20
  %s23 = scalar_select 0, %s22, %s20
  $region1: #{mpn_encoder_forward.1} parent=0
    #allocation5 [shape = 'u8[512]{0}', space=vmem, size = 0x400, scoped, tag = 'input window, operand 6, single buffered']
    #allocation6 [shape = 's32[2]{0}', space=sflag, size = 0x8, scoped, tag = 'scoped memory for mpn_encoder_forward.1']
    #allocation7 [shape = 'u8[512]{0}', space=vmem, size = 0x400, scoped, tag = 'input window, operand 9, single buffered']
    #allocation8 [shape = 's32[1]{0}', space=sflag, size = 0x4, scoped, tag = 'scoped memory for mpn_encoder_forward.1']
    #allocation9 [shape = 'u8[512]{0}', space=vmem, size = 0x400, scoped, tag = 'input window, operand 11, single buffered']
    #allocation10 [shape = 'u8[512]{0}', space=vmem, size = 0x400, scoped, tag = 'input window, operand 13, single buffered']
    #allocation11 [shape = 's32[1]{0}', space=sflag, size = 0x4, scoped, tag = 'scoped memory for mpn_encoder_forward.1']
    #allocation12 [shape = 'u8[32768]{0}', space=vmem, size = 0x8000, scoped, tag = 'input window, operand 14, single buffered']
    #allocation13 [shape = 'u8[512]{0}', space=vmem, size = 0x400, scoped, tag = 'input window, operand 15, single buffered']
    #allocation14 [shape = 's32[1]{0}', space=sflag, size = 0x4, scoped, tag = 'scoped memory for mpn_encoder_forward.1']
    #allocation15 [shape = 'u8[32768]{0}', space=vmem, size = 0x8000, scoped, tag = 'input window, operand 17, single buffered']
    #allocation16 [shape = 'u8[512]{0}', space=vmem, size = 0x400, scoped, tag = 'input window, operand 18, single buffered']
    #allocation17 [shape = 's32[1]{0}', space=sflag, size = 0x4, scoped, tag = 'scoped memory for mpn_encoder_forward.1']
    %24 = vsyncpa [#allocation6], 0
    %25 = vsyncpa [#allocation8], 0
    %26 = vsyncpa [#allocation11], 0
    %27 = vsyncpa [#allocation14], 0
    %28 = vsyncpa [#allocation17], 0
    loop: start=0, step=1, limit=12
    $region2: #{mpn_encoder_forward.1} parent=1 // loop_pre_header
      _
    $region3: #{mpn_encoder_forward.1} parent=1 // loop_header
      %s30 = sphi 0, %s34
      %p31 = scmp.ge.s32.totalorder %s30, 12
      %s37 = sphi 0, %s49
      %s38 = sphi 0, %s45
      %s39 = sphi 0, %s37
      %s40 = sphi 0, %s38
      %s41 = sphi 0, %s39
      %s42 = sphi 0, %s40
      %s52 = sphi 0, %s54
      %s55 = sphi 0, %s52
      %s56 = sphi 0, %s55
      %s72 = sphi 0, %s56
      %s76 = sphi 0, %s76
      %s78 = sphi 0, %s76
      %s79 = sphi 0, %s78
      %s93 = sphi 0, %s79
      %s99 = sphi 0, %s101
      %s102 = sphi 0, %s99
      %s103 = sphi 0, %s102
      %s119 = sphi 0, %s103
      %s125 = sphi 0, %s127
      %s128 = sphi 0, %s125
      %s129 = sphi 0, %s128
      %s145 = sphi 0, %s129
      %s151 = sphi 0, %s153
      %s154 = sphi 0, %s151
      %s155 = sphi 0, %s154
      %s171 = sphi 0, %s155
      %s175 = sphi 0, %s175
      %s177 = sphi 0, %s175
      %s178 = sphi 0, %s177
      %s192 = sphi 0, %s178
      %s196 = sphi 0, %s196
      %s198 = sphi 0, %s196
      %s199 = sphi 0, %s198
      %s213 = sphi 0, %s199
      %s217 = sphi 0, %s217
      %s219 = sphi 0, %s217
      %s220 = sphi 0, %s219
      %s234 = sphi 0, %s220
      %s238 = sphi 0, %s238
      %s240 = sphi 0, %s238
      %s241 = sphi 0, %s240
      %s255 = sphi 0, %s241
      %s259 = sphi 0, %s259
      %s261 = sphi 0, %s259
      %s262 = sphi 0, %s261
      %s276 = sphi 0, %s262
      %s280 = sphi 0, %s280
      %s282 = sphi 0, %s280
      %s283 = sphi 0, %s282
      %s297 = sphi 0, %s283
      %s301 = sphi 0, %s301
      %s303 = sphi 0, %s301
      %s304 = sphi 0, %s303
      %s318 = sphi 0, %s304
      %s322 = sphi 0, %s322
      %s324 = sphi 0, %s322
      %s325 = sphi 0, %s324
      %s339 = sphi 0, %s325
      %s343 = sphi 0, %s343
      %s345 = sphi 0, %s343
      %s346 = sphi 0, %s345
      %s360 = sphi 0, %s346
      %s364 = sphi 0, %s364
      %s366 = sphi 0, %s364
      %s367 = sphi 0, %s366
      %s381 = sphi 0, %s367
      %s385 = sphi 0, %s385
      %s387 = sphi 0, %s385
      %s388 = sphi 0, %s387
      %s402 = sphi 0, %s388
      %s406 = sphi 0, %s406
      %s408 = sphi 0, %s406
      %s409 = sphi 0, %s408
      %s423 = sphi 0, %s409
      %s427 = sphi 0, %s427
      %s429 = sphi 0, %s427
      %s430 = sphi 0, %s429
      %s444 = sphi 0, %s430
      %s448 = sphi 0, %s448
      %s450 = sphi 0, %s448
      %s451 = sphi 0, %s450
      %s465 = sphi 0, %s451
      %s469 = sphi 0, %s469
      %s471 = sphi 0, %s469
      %s472 = sphi 0, %s471
      %s486 = sphi 0, %s472
    $region4: #{mpn_encoder_forward.1} parent=1 // loop_header_branch
      %33 = sbr.rel (%p31) target = $region8
    $region5: #{mpn_encoder_forward.1} parent=1 // loop_body
      %s35 = ssub.s32 %s30, 1
      %s36 = ssub.s32 %s30, 2
      %s43 = sadd.s32 1, %s38
      %p44 = scmp.ge.s32.totalorder %s43, 2
      %s45 = scalar_select %p44, 0, %s43
      %s46 = sadd.s32 1, %s37
      %s47 = scalar_select %p44, %s46, %s37
      %p48 = scmp.ge.s32.totalorder %s47, 5
      %s49 = scalar_select %p48, 0, %s47
      %s50 = ssub.s32 %s38, %s45
      %p51 = scmp.eq.s32.totalorder %s50, 0
      %s53 = sadd.s32 %s52, 1
      %s54 = scalar_select %p51, %s52, %s53
      %p57 = pneg %p51
      %p58 = scmp.eq.s32.totalorder %s30, 9
      %p59 = por %p57, %p58
      %p60 = scmp.ne.s32.totalorder %s52, %s55
      %p61 = scmp.eq.s32.totalorder %s30, 0
      %p62 = por %p60, %p61
      %p63 = scmp.ne.s32.totalorder %s52, %s55
      %p64 = scmp.eq.s32.totalorder %s35, 9
      %p65 = por %p63, %p64
      %p66 = scmp.ne.s32.totalorder %s55, %s56
      %p67 = scmp.eq.s32.totalorder %s35, 0
      %p68 = por %p66, %p67
      %p69 = scmp.ne.s32.totalorder %s55, %s56
      %p70 = scmp.eq.s32.totalorder %s36, 9
      %p71 = por %p69, %p70
      %p73 = scmp.ne.s32.totalorder %s56, %s72
      %p74 = scmp.eq.s32.totalorder %s36, 0
      %p75 = por %p73, %p74
      %s77 = sadd.s32 %s76, 1
      %p80 = scmp.eq.s32.totalorder %s30, 9
      %p81 = scmp.ne.s32.totalorder %s76, %s78
      %p82 = scmp.eq.s32.totalorder %s30, 0
      %p83 = por %p81, %p82
      %p84 = scmp.ne.s32.totalorder %s76, %s78
      %p85 = scmp.eq.s32.totalorder %s35, 9
      %p86 = por %p84, %p85
      %p87 = scmp.ne.s32.totalorder %s78, %s79
      %p88 = scmp.eq.s32.totalorder %s35, 0
      %p89 = por %p87, %p88
      %p90 = scmp.ne.s32.totalorder %s78, %s79
      %p91 = scmp.eq.s32.totalorder %s36, 9
      %p92 = por %p90, %p91
      %p94 = scmp.ne.s32.totalorder %s79, %s93
      %p95 = scmp.eq.s32.totalorder %s36, 0
      %p96 = por %p94, %p95
      %s97 = ssub.s32 %s38, %s45
      %p98 = scmp.eq.s32.totalorder %s97, 0
      %s100 = sadd.s32 %s99, 1
      %s101 = scalar_select %p98, %s99, %s100
      %p104 = pneg %p98
      %p105 = scmp.eq.s32.totalorder %s30, 9
      %p106 = por %p104, %p105
      %p107 = scmp.ne.s32.totalorder %s99, %s102
      %p108 = scmp.eq.s32.totalorder %s30, 0
      %p109 = por %p107, %p108
      %p110 = scmp.ne.s32.totalorder %s99, %s102
      %p111 = scmp.eq.s32.totalorder %s35, 9
      %p112 = por %p110, %p111
      %p113 = scmp.ne.s32.totalorder %s102, %s103
      %p114 = scmp.eq.s32.totalorder %s35, 0
      %p115 = por %p113, %p114
      %p116 = scmp.ne.s32.totalorder %s102, %s103
      %p117 = scmp.eq.s32.totalorder %s36, 9
      %p118 = por %p116, %p117
      %p120 = scmp.ne.s32.totalorder %s103, %s119
      %p121 = scmp.eq.s32.totalorder %s36, 0
      %p122 = por %p120, %p121
      %s123 = ssub.s32 %s38, %s45
      %p124 = scmp.eq.s32.totalorder %s123, 0
      %s126 = sadd.s32 %s125, 1
      %s127 = scalar_select %p124, %s125, %s126
      %p130 = pneg %p124
      %p131 = scmp.eq.s32.totalorder %s30, 9
      %p132 = por %p130, %p131
      %p133 = scmp.ne.s32.totalorder %s125, %s128
      %p134 = scmp.eq.s32.totalorder %s30, 0
      %p135 = por %p133, %p134
      %p136 = scmp.ne.s32.totalorder %s125, %s128
      %p137 = scmp.eq.s32.totalorder %s35, 9
      %p138 = por %p136, %p137
      %p139 = scmp.ne.s32.totalorder %s128, %s129
      %p140 = scmp.eq.s32.totalorder %s35, 0
      %p141 = por %p139, %p140
      %p142 = scmp.ne.s32.totalorder %s128, %s129
      %p143 = scmp.eq.s32.totalorder %s36, 9
      %p144 = por %p142, %p143
      %p146 = scmp.ne.s32.totalorder %s129, %s145
      %p147 = scmp.eq.s32.totalorder %s36, 0
      %p148 = por %p146, %p147
      %s149 = ssub.s32 %s38, %s45
      %p150 = scmp.eq.s32.totalorder %s149, 0
      %s152 = sadd.s32 %s151, 1
      %s153 = scalar_select %p150, %s151, %s152
      %p156 = pneg %p150
      %p157 = scmp.eq.s32.totalorder %s30, 9
      %p158 = por %p156, %p157
      %p159 = scmp.ne.s32.totalorder %s151, %s154
      %p160 = scmp.eq.s32.totalorder %s30, 0
      %p161 = por %p159, %p160
      %p162 = scmp.ne.s32.totalorder %s151, %s154
      %p163 = scmp.eq.s32.totalorder %s35, 9
      %p164 = por %p162, %p163
      %p165 = scmp.ne.s32.totalorder %s154, %s155
      %p166 = scmp.eq.s32.totalorder %s35, 0
      %p167 = por %p165, %p166
      %p168 = scmp.ne.s32.totalorder %s154, %s155
      %p169 = scmp.eq.s32.totalorder %s36, 9
      %p170 = por %p168, %p169
      %p172 = scmp.ne.s32.totalorder %s155, %s171
      %p173 = scmp.eq.s32.totalorder %s36, 0
      %p174 = por %p172, %p173
      %s176 = sadd.s32 %s175, 1
      %p179 = scmp.eq.s32.totalorder %s30, 9
      %p180 = scmp.ne.s32.totalorder %s175, %s177
      %p181 = scmp.eq.s32.totalorder %s30, 0
      %p182 = por %p180, %p181
      %p183 = scmp.ne.s32.totalorder %s175, %s177
      %p184 = scmp.eq.s32.totalorder %s35, 9
      %p185 = por %p183, %p184
      %p186 = scmp.ne.s32.totalorder %s177, %s178
      %p187 = scmp.eq.s32.totalorder %s35, 0
      %p188 = por %p186, %p187
      %p189 = scmp.ne.s32.totalorder %s177, %s178
      %p190 = scmp.eq.s32.totalorder %s36, 9
      %p191 = por %p189, %p190
      %p193 = scmp.ne.s32.totalorder %s178, %s192
      %p194 = scmp.eq.s32.totalorder %s36, 0
      %p195 = por %p193, %p194
      %s197 = sadd.s32 %s196, 1
      %p200 = scmp.eq.s32.totalorder %s30, 9
      %p201 = scmp.ne.s32.totalorder %s196, %s198
      %p202 = scmp.eq.s32.totalorder %s30, 0
      %p203 = por %p201, %p202
      %p204 = scmp.ne.s32.totalorder %s196, %s198
      %p205 = scmp.eq.s32.totalorder %s35, 9
      %p206 = por %p204, %p205
      %p207 = scmp.ne.s32.totalorder %s198, %s199
      %p208 = scmp.eq.s32.totalorder %s35, 0
      %p209 = por %p207, %p208
      %p210 = scmp.ne.s32.totalorder %s198, %s199
      %p211 = scmp.eq.s32.totalorder %s36, 9
      %p212 = por %p210, %p211
      %p214 = scmp.ne.s32.totalorder %s199, %s213
      %p215 = scmp.eq.s32.totalorder %s36, 0
      %p216 = por %p214, %p215
      %s218 = sadd.s32 %s217, 1
      %p221 = scmp.eq.s32.totalorder %s30, 9
      %p222 = scmp.ne.s32.totalorder %s217, %s219
      %p223 = scmp.eq.s32.totalorder %s30, 0
      %p224 = por %p222, %p223
      %p225 = scmp.ne.s32.totalorder %s217, %s219
      %p226 = scmp.eq.s32.totalorder %s35, 9
      %p227 = por %p225, %p226
      %p228 = scmp.ne.s32.totalorder %s219, %s220
      %p229 = scmp.eq.s32.totalorder %s35, 0
      %p230 = por %p228, %p229
      %p231 = scmp.ne.s32.totalorder %s219, %s220
      %p232 = scmp.eq.s32.totalorder %s36, 9
      %p233 = por %p231, %p232
      %p235 = scmp.ne.s32.totalorder %s220, %s234
      %p236 = scmp.eq.s32.totalorder %s36, 0
      %p237 = por %p235, %p236
      %s239 = sadd.s32 %s238, 1
      %p242 = scmp.eq.s32.totalorder %s30, 9
      %p243 = scmp.ne.s32.totalorder %s238, %s240
      %p244 = scmp.eq.s32.totalorder %s30, 0
      %p245 = por %p243, %p244
      %p246 = scmp.ne.s32.totalorder %s238, %s240
      %p247 = scmp.eq.s32.totalorder %s35, 9
      %p248 = por %p246, %p247
      %p249 = scmp.ne.s32.totalorder %s240, %s241
      %p250 = scmp.eq.s32.totalorder %s35, 0
      %p251 = por %p249, %p250
      %p252 = scmp.ne.s32.totalorder %s240, %s241
      %p253 = scmp.eq.s32.totalorder %s36, 9
      %p254 = por %p252, %p253
      %p256 = scmp.ne.s32.totalorder %s241, %s255
      %p257 = scmp.eq.s32.totalorder %s36, 0
      %p258 = por %p256, %p257
      %s260 = sadd.s32 %s259, 1
      %p263 = scmp.eq.s32.totalorder %s30, 9
      %p264 = scmp.ne.s32.totalorder %s259, %s261
      %p265 = scmp.eq.s32.totalorder %s30, 0
      %p266 = por %p264, %p265
      %p267 = scmp.ne.s32.totalorder %s259, %s261
      %p268 = scmp.eq.s32.totalorder %s35, 9
      %p269 = por %p267, %p268
      %p270 = scmp.ne.s32.totalorder %s261, %s262
      %p271 = scmp.eq.s32.totalorder %s35, 0
      %p272 = por %p270, %p271
      %p273 = scmp.ne.s32.totalorder %s261, %s262
      %p274 = scmp.eq.s32.totalorder %s36, 9
      %p275 = por %p273, %p274
      %p277 = scmp.ne.s32.totalorder %s262, %s276
      %p278 = scmp.eq.s32.totalorder %s36, 0
      %p279 = por %p277, %p278
      %s281 = sadd.s32 %s280, 1
      %p284 = scmp.eq.s32.totalorder %s30, 9
      %p285 = scmp.ne.s32.totalorder %s280, %s282
      %p286 = scmp.eq.s32.totalorder %s30, 0
      %p287 = por %p285, %p286
      %p288 = scmp.ne.s32.totalorder %s280, %s282
      %p289 = scmp.eq.s32.totalorder %s35, 9
      %p290 = por %p288, %p289
      %p291 = scmp.ne.s32.totalorder %s282, %s283
      %p292 = scmp.eq.s32.totalorder %s35, 0
      %p293 = por %p291, %p292
      %p294 = scmp.ne.s32.totalorder %s282, %s283
      %p295 = scmp.eq.s32.totalorder %s36, 9
      %p296 = por %p294, %p295
      %p298 = scmp.ne.s32.totalorder %s283, %s297
      %p299 = scmp.eq.s32.totalorder %s36, 0
      %p300 = por %p298, %p299
      %s302 = sadd.s32 %s301, 1
      %p305 = scmp.eq.s32.totalorder %s30, 9
      %p306 = scmp.ne.s32.totalorder %s301, %s303
      %p307 = scmp.eq.s32.totalorder %s30, 0
      %p308 = por %p306, %p307
      %p309 = scmp.ne.s32.totalorder %s301, %s303
      %p310 = scmp.eq.s32.totalorder %s35, 9
      %p311 = por %p309, %p310
      %p312 = scmp.ne.s32.totalorder %s303, %s304
      %p313 = scmp.eq.s32.totalorder %s35, 0
      %p314 = por %p312, %p313
      %p315 = scmp.ne.s32.totalorder %s303, %s304
      %p316 = scmp.eq.s32.totalorder %s36, 9
      %p317 = por %p315, %p316
      %p319 = scmp.ne.s32.totalorder %s304, %s318
      %p320 = scmp.eq.s32.totalorder %s36, 0
      %p321 = por %p319, %p320
      %s323 = sadd.s32 %s322, 1
      %p326 = scmp.eq.s32.totalorder %s30, 9
      %p327 = scmp.ne.s32.totalorder %s322, %s324
      %p328 = scmp.eq.s32.totalorder %s30, 0
      %p329 = por %p327, %p328
      %p330 = scmp.ne.s32.totalorder %s322, %s324
      %p331 = scmp.eq.s32.totalorder %s35, 9
      %p332 = por %p330, %p331
      %p333 = scmp.ne.s32.totalorder %s324, %s325
      %p334 = scmp.eq.s32.totalorder %s35, 0
      %p335 = por %p333, %p334
      %p336 = scmp.ne.s32.totalorder %s324, %s325
      %p337 = scmp.eq.s32.totalorder %s36, 9
      %p338 = por %p336, %p337
      %p340 = scmp.ne.s32.totalorder %s325, %s339
      %p341 = scmp.eq.s32.totalorder %s36, 0
      %p342 = por %p340, %p341
      %s344 = sadd.s32 %s343, 1
      %p347 = scmp.eq.s32.totalorder %s30, 9
      %p348 = scmp.ne.s32.totalorder %s343, %s345
      %p349 = scmp.eq.s32.totalorder %s30, 0
      %p350 = por %p348, %p349
      %p351 = scmp.ne.s32.totalorder %s343, %s345
      %p352 = scmp.eq.s32.totalorder %s35, 9
      %p353 = por %p351, %p352
      %p354 = scmp.ne.s32.totalorder %s345, %s346
      %p355 = scmp.eq.s32.totalorder %s35, 0
      %p356 = por %p354, %p355
      %p357 = scmp.ne.s32.totalorder %s345, %s346
      %p358 = scmp.eq.s32.totalorder %s36, 9
      %p359 = por %p357, %p358
      %p361 = scmp.ne.s32.totalorder %s346, %s360
      %p362 = scmp.eq.s32.totalorder %s36, 0
      %p363 = por %p361, %p362
      %s365 = sadd.s32 %s364, 1
      %p368 = scmp.eq.s32.totalorder %s30, 9
      %p369 = scmp.ne.s32.totalorder %s364, %s366
      %p370 = scmp.eq.s32.totalorder %s30, 0
      %p371 = por %p369, %p370
      %p372 = scmp.ne.s32.totalorder %s364, %s366
      %p373 = scmp.eq.s32.totalorder %s35, 9
      %p374 = por %p372, %p373
      %p375 = scmp.ne.s32.totalorder %s366, %s367
      %p376 = scmp.eq.s32.totalorder %s35, 0
      %p377 = por %p375, %p376
      %p378 = scmp.ne.s32.totalorder %s366, %s367
      %p379 = scmp.eq.s32.totalorder %s36, 9
      %p380 = por %p378, %p379
      %p382 = scmp.ne.s32.totalorder %s367, %s381
      %p383 = scmp.eq.s32.totalorder %s36, 0
      %p384 = por %p382, %p383
      %s386 = sadd.s32 %s385, 1
      %p389 = scmp.eq.s32.totalorder %s30, 9
      %p390 = scmp.ne.s32.totalorder %s385, %s387
      %p391 = scmp.eq.s32.totalorder %s30, 0
      %p392 = por %p390, %p391
      %p393 = scmp.ne.s32.totalorder %s385, %s387
      %p394 = scmp.eq.s32.totalorder %s35, 9
      %p395 = por %p393, %p394
      %p396 = scmp.ne.s32.totalorder %s387, %s388
      %p397 = scmp.eq.s32.totalorder %s35, 0
      %p398 = por %p396, %p397
      %p399 = scmp.ne.s32.totalorder %s387, %s388
      %p400 = scmp.eq.s32.totalorder %s36, 9
      %p401 = por %p399, %p400
      %p403 = scmp.ne.s32.totalorder %s388, %s402
      %p404 = scmp.eq.s32.totalorder %s36, 0
      %p405 = por %p403, %p404
      %s407 = sadd.s32 %s406, 1
      %p410 = scmp.eq.s32.totalorder %s30, 9
      %p411 = scmp.ne.s32.totalorder %s406, %s408
      %p412 = scmp.eq.s32.totalorder %s30, 0
      %p413 = por %p411, %p412
      %p414 = scmp.ne.s32.totalorder %s406, %s408
      %p415 = scmp.eq.s32.totalorder %s35, 9
      %p416 = por %p414, %p415
      %p417 = scmp.ne.s32.totalorder %s408, %s409
      %p418 = scmp.eq.s32.totalorder %s35, 0
      %p419 = por %p417, %p418
      %p420 = scmp.ne.s32.totalorder %s408, %s409
      %p421 = scmp.eq.s32.totalorder %s36, 9
      %p422 = por %p420, %p421
      %p424 = scmp.ne.s32.totalorder %s409, %s423
      %p425 = scmp.eq.s32.totalorder %s36, 0
      %p426 = por %p424, %p425
      %s428 = sadd.s32 %s427, 1
      %p431 = scmp.eq.s32.totalorder %s30, 9
      %p432 = scmp.ne.s32.totalorder %s427, %s429
      %p433 = scmp.eq.s32.totalorder %s30, 0
      %p434 = por %p432, %p433
      %p435 = scmp.ne.s32.totalorder %s427, %s429
      %p436 = scmp.eq.s32.totalorder %s35, 9
      %p437 = por %p435, %p436
      %p438 = scmp.ne.s32.totalorder %s429, %s430
      %p439 = scmp.eq.s32.totalorder %s35, 0
      %p440 = por %p438, %p439
      %p441 = scmp.ne.s32.totalorder %s429, %s430
      %p442 = scmp.eq.s32.totalorder %s36, 9
      %p443 = por %p441, %p442
      %p445 = scmp.ne.s32.totalorder %s430, %s444
      %p446 = scmp.eq.s32.totalorder %s36, 0
      %p447 = por %p445, %p446
      %s449 = sadd.s32 %s448, 1
      %p452 = scmp.eq.s32.totalorder %s30, 9
      %p453 = scmp.ne.s32.totalorder %s448, %s450
      %p454 = scmp.eq.s32.totalorder %s30, 0
      %p455 = por %p453, %p454
      %p456 = scmp.ne.s32.totalorder %s448, %s450
      %p457 = scmp.eq.s32.totalorder %s35, 9
      %p458 = por %p456, %p457
      %p459 = scmp.ne.s32.totalorder %s450, %s451
      %p460 = scmp.eq.s32.totalorder %s35, 0
      %p461 = por %p459, %p460
      %p462 = scmp.ne.s32.totalorder %s450, %s451
      %p463 = scmp.eq.s32.totalorder %s36, 9
      %p464 = por %p462, %p463
      %p466 = scmp.ne.s32.totalorder %s451, %s465
      %p467 = scmp.eq.s32.totalorder %s36, 0
      %p468 = por %p466, %p467
      %s470 = sadd.s32 %s469, 1
      %p473 = scmp.eq.s32.totalorder %s30, 9
      %p474 = scmp.ne.s32.totalorder %s469, %s471
      %p475 = scmp.eq.s32.totalorder %s30, 0
      %p476 = por %p474, %p475
      %p477 = scmp.ne.s32.totalorder %s469, %s471
      %p478 = scmp.eq.s32.totalorder %s35, 9
      %p479 = por %p477, %p478
      %p480 = scmp.ne.s32.totalorder %s471, %s472
      %p481 = scmp.eq.s32.totalorder %s35, 0
      %p482 = por %p480, %p481
      %p483 = scmp.ne.s32.totalorder %s471, %s472
      %p484 = scmp.eq.s32.totalorder %s36, 9
      %p485 = por %p483, %p484
      %p487 = scmp.ne.s32.totalorder %s472, %s486
      %p488 = scmp.eq.s32.totalorder %s36, 0
      %p489 = por %p487, %p488
      %p490 = scmp.le.s32.totalorder 1, %s30
      %p491 = scmp.lt.s32.totalorder %s30, 11
      %p492 = pnand %p490, %p491
      %p493 = pneg %p492
      // Predicated region
      $region9: #{mpn_encoder_forward.1} parent=5 // pred_check
        _
      $region10: #{mpn_encoder_forward.1} parent=5 // pred_check_branch
        %495 = sbr.rel (%p492) target = $region12
      $region11: #{mpn_encoder_forward.1} parent=5 // pred_region
        %s496 = ssub.s32 %s30, 1
        // Predicated region
        $region13: #{mpn_encoder_forward.1} parent=11 // pred_check
          %p497 = pneg %p89
        $region14: #{mpn_encoder_forward.1} parent=11 // pred_check_branch
          %499 = sbr.rel (%p497) target = $region16
        $region15: #{mpn_encoder_forward.1} parent=11 // pred_region
          _
        $region16: #{mpn_encoder_forward.1} parent=11 // pred_fallthru
          _
        // Predicated region
        $region17: #{mpn_encoder_forward.1} parent=11 // pred_check
          %p500 = pneg %p188
        $region18: #{mpn_encoder_forward.1} parent=11 // pred_check_branch
          %502 = sbr.rel (%p500) target = $region20
        $region19: #{mpn_encoder_forward.1} parent=11 // pred_region
          _
        $region20: #{mpn_encoder_forward.1} parent=11 // pred_fallthru
          _
        // Predicated region
        $region21: #{mpn_encoder_forward.1} parent=11 // pred_check
          %p503 = pneg %p209
        $region22: #{mpn_encoder_forward.1} parent=11 // pred_check_branch
          %505 = sbr.rel (%p503) target = $region24
        $region23: #{mpn_encoder_forward.1} parent=11 // pred_region
          %s507 = ssub.s32 16, 16
          %508 = vsyncadd [#allocation6], %s507
          %s510 = sshll.u32 [#allocation5], 4
          %s511 = int_to_ptr.vmem [resolvable:$true] %s510
          %513 = dma.hbm_to_vmem [thread:$0]  %s6, 16, %s511, [#allocation6]
        $region24: #{mpn_encoder_forward.1} parent=11 // pred_fallthru
          _
        // Predicated region
        $region25: #{mpn_encoder_forward.1} parent=11 // pred_check
          %p514 = pneg %p230
        $region26: #{mpn_encoder_forward.1} parent=11 // pred_check_branch
          %516 = sbr.rel (%p514) target = $region28
        $region27: #{mpn_encoder_forward.1} parent=11 // pred_region
          _
        $region28: #{mpn_encoder_forward.1} parent=11 // pred_fallthru
          _
        // Predicated region
        $region29: #{mpn_encoder_forward.1} parent=11 // pred_check
          %p517 = pneg %p251
        $region30: #{mpn_encoder_forward.1} parent=11 // pred_check_branch
          %519 = sbr.rel (%p517) target = $region32
        $region31: #{mpn_encoder_forward.1} parent=11 // pred_region
          _
        $region32: #{mpn_encoder_forward.1} parent=11 // pred_fallthru
          _
        // Predicated region
        $region33: #{mpn_encoder_forward.1} parent=11 // pred_check
          %p520 = pneg %p272
        $region34: #{mpn_encoder_forward.1} parent=11 // pred_check_branch
          %522 = sbr.rel (%p520) target = $region36
        $region35: #{mpn_encoder_forward.1} parent=11 // pred_region
          %s524 = ssub.s32 16, 16
          %525 = vsyncadd [#allocation8], %s524
          %s527 = sshll.u32 [#allocation7], 4
          %s528 = int_to_ptr.vmem [resolvable:$true] %s527
          %530 = dma.hbm_to_vmem [thread:$0]  %s9, 16, %s528, [#allocation8]
        $region36: #{mpn_encoder_forward.1} parent=11 // pred_fallthru
          _
        // Predicated region
        $region37: #{mpn_encoder_forward.1} parent=11 // pred_check
          %p531 = pneg %p293
        $region38: #{mpn_encoder_forward.1} parent=11 // pred_check_branch
          %533 = sbr.rel (%p531) target = $region40
        $region39: #{mpn_encoder_forward.1} parent=11 // pred_region
          _
        $region40: #{mpn_encoder_forward.1} parent=11 // pred_fallthru
          _
        // Predicated region
        $region41: #{mpn_encoder_forward.1} parent=11 // pred_check
          %p534 = pneg %p314
        $region42: #{mpn_encoder_forward.1} parent=11 // pred_check_branch
          %536 = sbr.rel (%p534) target = $region44
        $region43: #{mpn_encoder_forward.1} parent=11 // pred_region
          %s538 = ssub.s32 16, 16
          %539 = vsyncadd [#allocation8], %s538
          %s541 = sshll.u32 [#allocation9], 4
          %s542 = int_to_ptr.vmem [resolvable:$true] %s541
          %544 = dma.hbm_to_vmem [thread:$0]  %s11, 16, %s542, [#allocation8]
        $region44: #{mpn_encoder_forward.1} parent=11 // pred_fallthru
          _
        // Predicated region
        $region45: #{mpn_encoder_forward.1} parent=11 // pred_check
          %p545 = pneg %p335
        $region46: #{mpn_encoder_forward.1} parent=11 // pred_check_branch
          %547 = sbr.rel (%p545) target = $region48
        $region47: #{mpn_encoder_forward.1} parent=11 // pred_region
          _
        $region48: #{mpn_encoder_forward.1} parent=11 // pred_fallthru
          _
        // Predicated region
        $region49: #{mpn_encoder_forward.1} parent=11 // pred_check
          %p548 = pneg %p356
        $region50: #{mpn_encoder_forward.1} parent=11 // pred_check_branch
          %550 = sbr.rel (%p548) target = $region52
        $region51: #{mpn_encoder_forward.1} parent=11 // pred_region
          %s552 = ssub.s32 16, 16
          %553 = vsyncadd [#allocation11], %s552
          %s555 = sshll.u32 [#allocation10], 4
          %s556 = int_to_ptr.vmem [resolvable:$true] %s555
          %558 = dma.hbm_to_vmem [thread:$0]  %s13, 16, %s556, [#allocation11]
        $region52: #{mpn_encoder_forward.1} parent=11 // pred_fallthru
          _
        // Predicated region
        $region53: #{mpn_encoder_forward.1} parent=11 // pred_check
          %p559 = pneg %p377
        $region54: #{mpn_encoder_forward.1} parent=11 // pred_check_branch
          %561 = sbr.rel (%p559) target = $region56
        $region55: #{mpn_encoder_forward.1} parent=11 // pred_region
          %s563 = ssub.s32 1024, 1024
          %564 = vsyncadd [#allocation11], %s563
          %s565 = sshll.u32 [#allocation12], 4
          %s566 = int_to_ptr.vmem [resolvable:$true] %s565
          %571 = dma.hbm_to_vmem [thread:$0]  %s14, 1024, %s566, [#allocation11], 64, 64, 4
        $region56: #{mpn_encoder_forward.1} parent=11 // pred_fallthru
          _
        // Predicated region
        $region57: #{mpn_encoder_forward.1} parent=11 // pred_check
          %p572 = pneg %p398
        $region58: #{mpn_encoder_forward.1} parent=11 // pred_check_branch
          %574 = sbr.rel (%p572) target = $region60
        $region59: #{mpn_encoder_forward.1} parent=11 // pred_region
          %s576 = ssub.s32 16, 16
          %577 = vsyncadd [#allocation14], %s576
          %s579 = sshll.u32 [#allocation13], 4
          %s580 = int_to_ptr.vmem [resolvable:$true] %s579
          %582 = dma.hbm_to_vmem [thread:$0]  %s15, 16, %s580, [#allocation14]
        $region60: #{mpn_encoder_forward.1} parent=11 // pred_fallthru
          _
        // Predicated region
        $region61: #{mpn_encoder_forward.1} parent=11 // pred_check
          %p583 = pneg %p419
        $region62: #{mpn_encoder_forward.1} parent=11 // pred_check_branch
          %585 = sbr.rel (%p583) target = $region64
        $region63: #{mpn_encoder_forward.1} parent=11 // pred_region
          _
        $region64: #{mpn_encoder_forward.1} parent=11 // pred_fallthru
          _
        // Predicated region
        $region65: #{mpn_encoder_forward.1} parent=11 // pred_check
          %p586 = pneg %p440
        $region66: #{mpn_encoder_forward.1} parent=11 // pred_check_branch
          %588 = sbr.rel (%p586) target = $region68
        $region67: #{mpn_encoder_forward.1} parent=11 // pred_region
          %s590 = ssub.s32 1024, 1024
          %591 = vsyncadd [#allocation14], %s590
          %s592 = sshll.u32 [#allocation15], 4
          %s593 = int_to_ptr.vmem [resolvable:$true] %s592
          %598 = dma.hbm_to_vmem [thread:$0]  %s17, 1024, %s593, [#allocation14], 64, 64, 4
        $region68: #{mpn_encoder_forward.1} parent=11 // pred_fallthru
          _
        // Predicated region
        $region69: #{mpn_encoder_forward.1} parent=11 // pred_check
          %p599 = pneg %p461
        $region70: #{mpn_encoder_forward.1} parent=11 // pred_check_branch
          %601 = sbr.rel (%p599) target = $region72
        $region71: #{mpn_encoder_forward.1} parent=11 // pred_region
          %s603 = ssub.s32 16, 16
          %604 = vsyncadd [#allocation17], %s603
          %s606 = sshll.u32 [#allocation16], 4
          %s607 = int_to_ptr.vmem [resolvable:$true] %s606
          %609 = dma.hbm_to_vmem [thread:$0]  %s18, 16, %s607, [#allocation17]
        $region72: #{mpn_encoder_forward.1} parent=11 // pred_fallthru
          _
      $region12: #{mpn_encoder_forward.1} parent=5 // pred_fallthru
        _
      %p610 = scmp.lt.s32.totalorder %s30, 10
      // Predicated region
      $region73: #{mpn_encoder_forward.1} parent=5 // pred_check
        %p611 = pneg %p610
      $region74: #{mpn_encoder_forward.1} parent=5 // pred_check_branch
        %613 = sbr.rel (%p611) target = $region76
      $region75: #{mpn_encoder_forward.1} parent=5 // pred_region
        // Predicated region
        $region77: #{mpn_encoder_forward.1} parent=75 // pred_check
          %p614 = pneg %p62
        $region78: #{mpn_encoder_forward.1} parent=75 // pred_check_branch
          %616 = sbr.rel (%p614) target = $region80
        $region79: #{mpn_encoder_forward.1} parent=75 // pred_region
          %s617 = smul.u32 2, %s38
          %p618 = scmp.lt.s32.totalorder %s617, 3
          %s619 = scalar_select %p618, %s617, 3
          %s620 = smul.addr %s619, 4
          %s621 = scalar_lea.vmem %s0, %s620
          %s622 = smul.u32 2, %s38
        $region80: #{mpn_encoder_forward.1} parent=75 // pred_fallthru
          _
        // Predicated region
        $region81: #{mpn_encoder_forward.1} parent=75 // pred_check
          %p623 = pneg %p109
        $region82: #{mpn_encoder_forward.1} parent=75 // pred_check_branch
          %625 = sbr.rel (%p623) target = $region84
        $region83: #{mpn_encoder_forward.1} parent=75 // pred_region
          %s626 = smul.u32 2, %s38
          %p627 = scmp.lt.s32.totalorder %s626, 3
          %s628 = scalar_select %p627, %s626, 3
          %s629 = smul.addr %s628, 4
          %s630 = scalar_lea.vmem %s2, %s629
          %s631 = smul.u32 2, %s38
        $region84: #{mpn_encoder_forward.1} parent=75 // pred_fallthru
          _
        // Predicated region
        $region85: #{mpn_encoder_forward.1} parent=75 // pred_check
          %p632 = pneg %p135
        $region86: #{mpn_encoder_forward.1} parent=75 // pred_check_branch
          %634 = sbr.rel (%p632) target = $region88
        $region87: #{mpn_encoder_forward.1} parent=75 // pred_region
          %s635 = smul.u32 2, %s38
          %p636 = scmp.lt.s32.totalorder %s635, 3
          %s637 = scalar_select %p636, %s635, 3
          %s638 = smul.addr %s637, 4
          %s639 = scalar_lea.vmem %s3, %s638
          %s640 = smul.u32 2, %s38
        $region88: #{mpn_encoder_forward.1} parent=75 // pred_fallthru
          _
        // Predicated region
        $region89: #{mpn_encoder_forward.1} parent=75 // pred_check
          %p641 = pneg %p161
        $region90: #{mpn_encoder_forward.1} parent=75 // pred_check_branch
          %643 = sbr.rel (%p641) target = $region92
        $region91: #{mpn_encoder_forward.1} parent=75 // pred_region
          %s644 = smul.u32 2, %s38
          %p645 = scmp.lt.s32.totalorder %s644, 3
          %s646 = scalar_select %p645, %s644, 3
          %s647 = smul.addr %s646, 8
          %s648 = scalar_lea.vmem %s4, %s647
          %s649 = smul.u32 2, %s38
        $region92: #{mpn_encoder_forward.1} parent=75 // pred_fallthru
          _
      $region76: #{mpn_encoder_forward.1} parent=5 // pred_fallthru
        _
      %p650 = scmp.le.s32.totalorder 1, %s30
      %p651 = scmp.lt.s32.totalorder %s30, 11
      %p652 = pnand %p650, %p651
      %p653 = pneg %p652
      // Predicated region
      $region93: #{mpn_encoder_forward.1} parent=5 // pred_check
        _
      $region94: #{mpn_encoder_forward.1} parent=5 // pred_check_branch
        %655 = sbr.rel (%p652) target = $region96
      $region95: #{mpn_encoder_forward.1} parent=5 // pred_region
        %s656 = ssub.s32 %s30, 1
        // Predicated region
        $region97: #{mpn_encoder_forward.1} parent=95 // pred_check
          %p657 = pneg %p209
        $region98: #{mpn_encoder_forward.1} parent=95 // pred_check_branch
          %659 = sbr.rel (%p657) target = $region100
        $region99: #{mpn_encoder_forward.1} parent=95 // pred_region
          %660 = dma.done [#allocation6], 16
        $region100: #{mpn_encoder_forward.1} parent=95 // pred_fallthru
          _
        // Predicated region
        $region101: #{mpn_encoder_forward.1} parent=95 // pred_check
          %p661 = pneg %p272
        $region102: #{mpn_encoder_forward.1} parent=95 // pred_check_branch
          %663 = sbr.rel (%p661) target = $region104
        $region103: #{mpn_encoder_forward.1} parent=95 // pred_region
          %664 = dma.done [#allocation8], 16
        $region104: #{mpn_encoder_forward.1} parent=95 // pred_fallthru
          _
        // Predicated region
        $region105: #{mpn_encoder_forward.1} parent=95 // pred_check
          %p665 = pneg %p314
        $region106: #{mpn_encoder_forward.1} parent=95 // pred_check_branch
          %667 = sbr.rel (%p665) target = $region108
        $region107: #{mpn_encoder_forward.1} parent=95 // pred_region
          %668 = dma.done [#allocation8], 16
        $region108: #{mpn_encoder_forward.1} parent=95 // pred_fallthru
          _
        // Predicated region
        $region109: #{mpn_encoder_forward.1} parent=95 // pred_check
          %p669 = pneg %p356
        $region110: #{mpn_encoder_forward.1} parent=95 // pred_check_branch
          %671 = sbr.rel (%p669) target = $region112
        $region111: #{mpn_encoder_forward.1} parent=95 // pred_region
          %672 = dma.done [#allocation11], 16
        $region112: #{mpn_encoder_forward.1} parent=95 // pred_fallthru
          _
        // Predicated region
        $region113: #{mpn_encoder_forward.1} parent=95 // pred_check
          %p673 = pneg %p377
        $region114: #{mpn_encoder_forward.1} parent=95 // pred_check_branch
          %675 = sbr.rel (%p673) target = $region116
        $region115: #{mpn_encoder_forward.1} parent=95 // pred_region
          %676 = dma.done [#allocation11], 1024
        $region116: #{mpn_encoder_forward.1} parent=95 // pred_fallthru
          _
        // Predicated region
        $region117: #{mpn_encoder_forward.1} parent=95 // pred_check
          %p677 = pneg %p398
        $region118: #{mpn_encoder_forward.1} parent=95 // pred_check_branch
          %679 = sbr.rel (%p677) target = $region120
        $region119: #{mpn_encoder_forward.1} parent=95 // pred_region
          %680 = dma.done [#allocation14], 16
        $region120: #{mpn_encoder_forward.1} parent=95 // pred_fallthru
          _
        // Predicated region
        $region121: #{mpn_encoder_forward.1} parent=95 // pred_check
          %p681 = pneg %p440
        $region122: #{mpn_encoder_forward.1} parent=95 // pred_check_branch
          %683 = sbr.rel (%p681) target = $region124
        $region123: #{mpn_encoder_forward.1} parent=95 // pred_region
          %684 = dma.done [#allocation14], 1024
        $region124: #{mpn_encoder_forward.1} parent=95 // pred_fallthru
          _
        // Predicated region
        $region125: #{mpn_encoder_forward.1} parent=95 // pred_check
          %p685 = pneg %p461
        $region126: #{mpn_encoder_forward.1} parent=95 // pred_check_branch
          %687 = sbr.rel (%p685) target = $region128
        $region127: #{mpn_encoder_forward.1} parent=95 // pred_region
          %688 = dma.done [#allocation17], 16
        $region128: #{mpn_encoder_forward.1} parent=95 // pred_fallthru
          _
        %s689 = smul.u32 2, %s40
        %p690 = scmp.lt.s32.totalorder %s689, 3
        %s691 = scalar_select %p690, %s689, 3
        %s692 = smul.addr %s691, 4
        %s693 = scalar_lea.vmem %s0, %s692
        %p694 = pneg %p68
        %p695 = pneg %p65
        %p696 = pneg %p89
        %p697 = pneg %p86
        %s698 = smul.u32 2, %s40
        %p699 = scmp.lt.s32.totalorder %s698, 3
        %s700 = scalar_select %p699, %s698, 3
        %s701 = smul.addr %s700, 4
        %s702 = scalar_lea.vmem %s2, %s701
        %p703 = pneg %p115
        %p704 = pneg %p112
        %s705 = smul.u32 2, %s40
        %p706 = scmp.lt.s32.totalorder %s705, 3
        %s707 = scalar_select %p706, %s705, 3
        %s708 = smul.addr %s707, 4
        %s709 = scalar_lea.vmem %s3, %s708
        %p710 = pneg %p141
        %p711 = pneg %p138
        %s712 = smul.u32 2, %s40
        %p713 = scmp.lt.s32.totalorder %s712, 3
        %s714 = scalar_select %p713, %s712, 3
        %s715 = smul.addr %s714, 8
        %s716 = scalar_lea.vmem %s4, %s715
        %p717 = pneg %p167
        %p718 = pneg %p164
        %p719 = pneg %p188
        %p720 = pneg %p185
        %p721 = pneg %p209
        %p722 = pneg %p206
        %p723 = pneg %p230
        %p724 = pneg %p227
        %p725 = pneg %p251
        %p726 = pneg %p248
        %p727 = pneg %p272
        %p728 = pneg %p269
        %p729 = pneg %p293
        %p730 = pneg %p290
        %p731 = pneg %p314
        %p732 = pneg %p311
        %p733 = pneg %p335
        %p734 = pneg %p332
        %p735 = pneg %p356
        %p736 = pneg %p353
        %p737 = pneg %p377
        %p738 = pneg %p374
        %p739 = pneg %p398
        %p740 = pneg %p395
        %p741 = pneg %p419
        %p742 = pneg %p416
        %p743 = pneg %p440
        %p744 = pneg %p437
        %p745 = pneg %p461
        %p746 = pneg %p458
        %p747 = pneg %p482
        %p748 = pneg %p479
        %s749 = smul.u32 2, %s40
        %p750 = scmp.lt.s32.totalorder %s749, 3
        %s751 = scalar_select %p750, %s749, 3
        %s752 = smul.addr %s751, 4
        %s753 = scalar_lea.vmem %s0, %s752
        %s754 = smul.u32 2, %s40
        %s755 = smul.u32 2, %s40
        %p756 = scmp.lt.s32.totalorder %s755, 3
        %s757 = scalar_select %p756, %s755, 3
        %s758 = smul.addr %s757, 4
        %s759 = scalar_lea.vmem %s2, %s758
        %s760 = smul.u32 2, %s40
        %s761 = smul.u32 2, %s40
        %p762 = scmp.lt.s32.totalorder %s761, 3
        %s763 = scalar_select %p762, %s761, 3
        %s764 = smul.addr %s763, 4
        %s765 = scalar_lea.vmem %s3, %s764
        %s766 = smul.u32 2, %s40
        %s767 = smul.u32 2, %s40
        %p768 = scmp.lt.s32.totalorder %s767, 3
        %s769 = scalar_select %p768, %s767, 3
        %s770 = smul.addr %s769, 8
        %s771 = scalar_lea.vmem %s4, %s770
        %s772 = smul.u32 2, %s40
        %s774 = smul.u32 %s40, 16
        %v775 = vlaneseq
        %v776 = vshrl.u32 %v775, 7
        %v777 = vadd.s32 %v776, 8
        %v778 = vstv %s774
        %v779 = vadd.s32 %v776, %v778
        %v780 = vadd.s32 %v777, %v778
        %vm781 = vcmp.ne.s32.totalorder %v779, 0
        %vm782 = vcmp.ne.s32.totalorder %v780, 0
        %v783 = vsel %vm781, 1, 0
        %v784 = vsel %vm782, 1, 0
        %v785 = vcvt.s32.f32 %v783
        %v786 = vcvt.s32.f32 %v784
        %p787 = scmp.eq.s32.totalorder %s39, 0
        %p788 = scmp.eq.s32.totalorder %s40, 0
        %p789 = pnand %p787, %p788
        %p790 = pneg %p789
        // Predicated region
        $region129: #{mpn_encoder_forward.1} parent=95 // pred_check
          _
        $region130: #{mpn_encoder_forward.1} parent=95 // pred_check_branch
          %792 = sbr.rel (%p789) target = $region132
        $region131: #{mpn_encoder_forward.1} parent=95 // pred_region
          %793 = vst [vmem:[%s19] sm:$0xff] 0.0
        $region132: #{mpn_encoder_forward.1} parent=95 // pred_fallthru
          _
        // Predicated region
        $region133: #{mpn_encoder_forward.1} parent=95 // pred_check
          %p794 = pneg %p787
        $region134: #{mpn_encoder_forward.1} parent=95 // pred_check_branch
          %796 = sbr.rel (%p794) target = $region136
        $region135: #{mpn_encoder_forward.1} parent=95 // pred_region
          %v797 = vld [vmem:[%s753] sm:$0xf]
          %v798 = vld [vmem:[%s753 + $0x4] sm:$0xf]
          %v799 = vld [vmem:[%s5] sm:$0xf]
          %v800 = vld [vmem:[%s5 + $0x4] sm:$0xf]
          %v801 = vld [vmem:[%s5 + $0x8] sm:$0xf]
          %v802 = vld [vmem:[%s5 + $0xc] sm:$0xf]
          %v803 = vld [vmem:[%s5 + $0x10] sm:$0xf]
          %v804 = vld [vmem:[%s5 + $0x14] sm:$0xf]
          %v805 = vld [vmem:[%s5 + $0x18] sm:$0xf]
          %v806 = vld [vmem:[%s5 + $0x1c] sm:$0xf]
          %v807 = vld [vmem:[%s5 + $0x20] sm:$0xf]
          %v808 = vld [vmem:[%s5 + $0x24] sm:$0xf]
          %v809 = vld [vmem:[%s5 + $0x28] sm:$0xf]
          %v810 = vld [vmem:[%s5 + $0x2c] sm:$0xf]
          %v811 = vld [vmem:[%s5 + $0x30] sm:$0xf]
          %v812 = vld [vmem:[%s5 + $0x34] sm:$0xf]
          %v813 = vld [vmem:[%s5 + $0x38] sm:$0xf]
          %v814 = vld [vmem:[%s5 + $0x3c] sm:$0xf]
          %v815 = vld [vmem:[#allocation5] sm:$0x1]
          %v817 = vlaneseq
          %v818 = vshrl.u32 %v817, 7
          %v819 = vsub.s32 0, %v818
          %v820 = vrot.slane %v815, %v819
          %v824 = vunpack.c.l.b16 %v797
          %v825 = vunpack.c.l.b16 %v798
          %v826 = vpack.c.b16 %v825, %v824
          %v844 = vunpack.c.l.b16 %v799
          %v845 = vunpack.c.l.b16 %v800
          %v846 = vunpack.c.l.b16 %v801
          %v847 = vunpack.c.l.b16 %v802
          %v848 = vunpack.c.l.b16 %v803
          %v849 = vunpack.c.l.b16 %v804
          %v850 = vunpack.c.l.b16 %v805
          %v851 = vunpack.c.l.b16 %v806
          %v852 = vunpack.c.l.b16 %v807
          %v853 = vunpack.c.l.b16 %v808
          %v854 = vunpack.c.l.b16 %v809
          %v855 = vunpack.c.l.b16 %v810
          %v856 = vunpack.c.l.b16 %v811
          %v857 = vunpack.c.l.b16 %v812
          %v858 = vunpack.c.l.b16 %v813
          %v859 = vunpack.c.l.b16 %v814
          %v860 = vpack.c.b16 %v845, %v844
          %v861 = vpack.c.b16 %v847, %v846
          %v862 = vpack.c.b16 %v849, %v848
          %v863 = vpack.c.b16 %v851, %v850
          %v864 = vpack.c.b16 %v853, %v852
          %v865 = vpack.c.b16 %v855, %v854
          %v866 = vpack.c.b16 %v857, %v856
          %v867 = vpack.c.b16 %v859, %v858
          %876 = vmatprep.subr.bf16.mxu0 0
          %877 = vmatpush1.bf16.msra.mxu0 %v867
          %878 = vmatprep.subr.bf16.mxu0 0
          %879 = vmatpush1.bf16.msra.mxu0 %v866
          %880 = vmatprep.subr.bf16.mxu0 0
          %881 = vmatpush1.bf16.msra.mxu0 %v865
          %882 = vmatprep.subr.bf16.mxu0 0
          %883 = vmatpush1.bf16.msra.mxu0 %v864
          %884 = vmatprep.subr.bf16.mxu0 0
          %885 = vmatpush1.bf16.msra.mxu0 %v863
          %886 = vmatprep.subr.bf16.mxu0 0
          %887 = vmatpush1.bf16.msra.mxu0 %v862
          %888 = vmatprep.subr.bf16.mxu0 0
          %889 = vmatpush1.bf16.msra.mxu0 %v861
          %890 = vmatprep.subr.bf16.mxu0 0
          %891 = vmatpush1.bf16.msra.mxu0 %v860
          %892 = vmatprep.subr.bf16.mxu0 0
          %893 = vmatpush2.bf16.msra.mxu0 0
          %894 = vmatprep.subr.bf16.mxu0 0
          %895 = vmatpush2.bf16.msra.mxu0 0
          %896 = vmatprep.subr.bf16.mxu0 0
          %897 = vmatpush2.bf16.msra.mxu0 0
          %898 = vmatprep.subr.bf16.mxu0 0
          %899 = vmatpush2.bf16.msra.mxu0 0
          %900 = vmatprep.subr.bf16.mxu0 0
          %901 = vmatpush2.bf16.msra.mxu0 0
          %902 = vmatprep.subr.bf16.mxu0 0
          %903 = vmatpush2.bf16.msra.mxu0 0
          %904 = vmatprep.subr.bf16.mxu0 0
          %905 = vmatpush2.bf16.msra.mxu0 0
          %906 = vmatprep.subr.bf16.mxu0 0
          %907 = vmatpush2.bf16.msra.mxu0 0
          %908 = vmatprep.mubr.bf16.mxu0 0
          %909 = vmatmul.mubr.bf16.gmra.mxu0 %v826
          %v910 = vpop.f32.mrf.mxu0
          %v911 = vadd.f32 %v820, %v910
          %v912 = vpop.f32.mrf.mxu0
          %v913 = vpop.f32.mrf.mxu0
          %v914 = vadd.f32 %v820, %v913
          %v915 = vpop.f32.mrf.mxu0
          %916 = vdwg.mxu0
          %v917 = vmax.f32 %v911, 0.0
          %v918 = vmax.f32 %v914, 0.0
          %v919 = vmul.f32 %v917, %v785
          %v920 = vmul.f32 %v918, %v786
          %s921 = scalar_lea.vmem [#allocation2], %s774
          %922 = vst [vmem:[%s921] sm:$0xff] %v919
          %923 = vst [vmem:[%s921 + $0x8] sm:$0xff] %v920
          %v924 = vld [vmem:[%s765] sm:$0xf]
          %v925 = vld [vmem:[%s765 + $0x4] sm:$0xf]
          %v926 = vld [vmem:[%s1] sm:$0xf]
          %v927 = vld [vmem:[%s1 + $0x4] sm:$0xf]
          %v928 = vld [vmem:[%s1 + $0x8] sm:$0xf]
          %v929 = vld [vmem:[%s1 + $0xc] sm:$0xf]
          %v932 = vunpack.c.l.b16 %v924
          %v933 = vunpack.c.l.b16 %v925
          %v934 = vpack.c.b16 %v933, %v932
          %v939 = vunpack.c.l.b16 %v926
          %v940 = vunpack.c.l.b16 %v927
          %v941 = vunpack.c.l.b16 %v928
          %v942 = vunpack.c.l.b16 %v929
          %v943 = vpack.c.b16 %v940, %v939
          %v944 = vpack.c.b16 %v942, %v941
          %vm947 = vcmask 261120
          %v949 = vsel %vm947, %v934, 0
          %951 = vmatprep.subr.bf16.mxu0 0
          %952 = vmatpush1.bf16.msra.mxu0 0
          %953 = vmatprep.subr.bf16.mxu0 0
          %954 = vmatpush1.bf16.msra.mxu0 0
          %955 = vmatprep.subr.bf16.mxu0 0
          %956 = vmatpush1.bf16.msra.mxu0 0
          %957 = vmatprep.subr.bf16.mxu0 0
          %958 = vmatpush1.bf16.msra.mxu0 0
          %959 = vmatprep.subr.bf16.mxu0 0
          %960 = vmatpush1.bf16.msra.mxu0 0
          %961 = vmatprep.subr.bf16.mxu0 0
          %962 = vmatpush1.bf16.msra.mxu0 0
          %963 = vmatprep.subr.bf16.mxu0 0
          %964 = vmatpush1.bf16.msra.mxu0 %v944
          %965 = vmatprep.subr.bf16.mxu0 0
          %966 = vmatpush1.bf16.msra.mxu0 %v943
          %967 = vmatprep.subr.bf16.mxu0 0
          %968 = vmatpush2.bf16.msra.mxu0 0
          %969 = vmatprep.subr.bf16.mxu0 0
          %970 = vmatpush2.bf16.msra.mxu0 0
          %971 = vmatprep.subr.bf16.mxu0 0
          %972 = vmatpush2.bf16.msra.mxu0 0
          %973 = vmatprep.subr.bf16.mxu0 0
          %974 = vmatpush2.bf16.msra.mxu0 0
          %975 = vmatprep.subr.bf16.mxu0 0
          %976 = vmatpush2.bf16.msra.mxu0 0
          %977 = vmatprep.subr.bf16.mxu0 0
          %978 = vmatpush2.bf16.msra.mxu0 0
          %979 = vmatprep.subr.bf16.mxu0 0
          %980 = vmatpush2.bf16.msra.mxu0 0
          %981 = vmatprep.subr.bf16.mxu0 0
          %982 = vmatpush2.bf16.msra.mxu0 0
          %983 = vmatprep.mubr.bf16.mxu0 0
          %984 = vmatmul.mubr.bf16.gmra.mxu0 %v949
          %v985 = vpop.f32.mrf.mxu0
          %v986 = vadd.f32 0.0, %v985
          %v987 = vpop.f32.mrf.mxu0
          %v988 = vpop.f32.mrf.mxu0
          %v989 = vadd.f32 0.0, %v988
          %v990 = vpop.f32.mrf.mxu0
          %991 = vdwg.mxu0
          %v992 = vmax.f32 %v986, 0.0
          %v993 = vmax.f32 %v989, 0.0
          %v994 = vpack.c.bf16 %v993, %v992
          %v995 = vld [vmem:[%s8] sm:$0xf]
          %v996 = vld [vmem:[%s8 + $0x4] sm:$0xf]
          %v997 = vld [vmem:[%s8 + $0x8] sm:$0xf]
          %v998 = vld [vmem:[%s8 + $0xc] sm:$0xf]
          %v999 = vld [vmem:[%s8 + $0x10] sm:$0xf]
          %v1000 = vld [vmem:[%s8 + $0x14] sm:$0xf]
          %v1001 = vld [vmem:[%s8 + $0x18] sm:$0xf]
          %v1002 = vld [vmem:[%s8 + $0x1c] sm:$0xf]
          %v1003 = vld [vmem:[%s8 + $0x20] sm:$0xf]
          %v1004 = vld [vmem:[%s8 + $0x24] sm:$0xf]
          %v1005 = vld [vmem:[%s8 + $0x28] sm:$0xf]
          %v1006 = vld [vmem:[%s8 + $0x2c] sm:$0xf]
          %v1007 = vld [vmem:[%s8 + $0x30] sm:$0xf]
          %v1008 = vld [vmem:[%s8 + $0x34] sm:$0xf]
          %v1009 = vld [vmem:[%s8 + $0x38] sm:$0xf]
          %v1010 = vld [vmem:[%s8 + $0x3c] sm:$0xf]
          %v1011 = vld [vmem:[#allocation7] sm:$0x1]
          %v1013 = vlaneseq
          %v1014 = vshrl.u32 %v1013, 7
          %v1015 = vsub.s32 0, %v1014
          %v1016 = vrot.slane %v1011, %v1015
          %v1034 = vunpack.c.l.b16 %v995
          %v1035 = vunpack.c.l.b16 %v996
          %v1036 = vunpack.c.l.b16 %v997
          %v1037 = vunpack.c.l.b16 %v998
          %v1038 = vunpack.c.l.b16 %v999
          %v1039 = vunpack.c.l.b16 %v1000
          %v1040 = vunpack.c.l.b16 %v1001
          %v1041 = vunpack.c.l.b16 %v1002
          %v1042 = vunpack.c.l.b16 %v1003
          %v1043 = vunpack.c.l.b16 %v1004
          %v1044 = vunpack.c.l.b16 %v1005
          %v1045 = vunpack.c.l.b16 %v1006
          %v1046 = vunpack.c.l.b16 %v1007
          %v1047 = vunpack.c.l.b16 %v1008
          %v1048 = vunpack.c.l.b16 %v1009
          %v1049 = vunpack.c.l.b16 %v1010
          %v1050 = vpack.c.b16 %v1035, %v1034
          %v1051 = vpack.c.b16 %v1037, %v1036
          %v1052 = vpack.c.b16 %v1039, %v1038
          %v1053 = vpack.c.b16 %v1041, %v1040
          %v1054 = vpack.c.b16 %v1043, %v1042
          %v1055 = vpack.c.b16 %v1045, %v1044
          %v1056 = vpack.c.b16 %v1047, %v1046
          %v1057 = vpack.c.b16 %v1049, %v1048
          %1066 = vmatprep.subr.bf16.mxu0 0
          %1067 = vmatpush1.bf16.msra.mxu0 %v1057
          %1068 = vmatprep.subr.bf16.mxu0 0
          %1069 = vmatpush1.bf16.msra.mxu0 %v1056
          %1070 = vmatprep.subr.bf16.mxu0 0
          %1071 = vmatpush1.bf16.msra.mxu0 %v1055
          %1072 = vmatprep.subr.bf16.mxu0 0
          %1073 = vmatpush1.bf16.msra.mxu0 %v1054
          %1074 = vmatprep.subr.bf16.mxu0 0
          %1075 = vmatpush1.bf16.msra.mxu0 %v1053
          %1076 = vmatprep.subr.bf16.mxu0 0
          %1077 = vmatpush1.bf16.msra.mxu0 %v1052
          %1078 = vmatprep.subr.bf16.mxu0 0
          %1079 = vmatpush1.bf16.msra.mxu0 %v1051
          %1080 = vmatprep.subr.bf16.mxu0 0
          %1081 = vmatpush1.bf16.msra.mxu0 %v1050
          %1082 = vmatprep.subr.bf16.mxu0 0
          %1083 = vmatpush2.bf16.msra.mxu0 0
          %1084 = vmatprep.subr.bf16.mxu0 0
          %1085 = vmatpush2.bf16.msra.mxu0 0
          %1086 = vmatprep.subr.bf16.mxu0 0
          %1087 = vmatpush2.bf16.msra.mxu0 0
          %1088 = vmatprep.subr.bf16.mxu0 0
          %1089 = vmatpush2.bf16.msra.mxu0 0
          %1090 = vmatprep.subr.bf16.mxu0 0
          %1091 = vmatpush2.bf16.msra.mxu0 0
          %1092 = vmatprep.subr.bf16.mxu0 0
          %1093 = vmatpush2.bf16.msra.mxu0 0
          %1094 = vmatprep.subr.bf16.mxu0 0
          %1095 = vmatpush2.bf16.msra.mxu0 0
          %1096 = vmatprep.subr.bf16.mxu0 0
          %1097 = vmatpush2.bf16.msra.mxu0 0
          %1098 = vmatprep.mubr.bf16.mxu0 0
          %1099 = vmatmul.mubr.bf16.gmra.mxu0 %v994
          %v1100 = vpop.f32.mrf.mxu0
          %v1101 = vadd.f32 %v1016, %v1100
          %v1102 = vpop.f32.mrf.mxu0
          %v1103 = vpop.f32.mrf.mxu0
          %v1104 = vadd.f32 %v1016, %v1103
          %v1105 = vpop.f32.mrf.mxu0
          %1106 = vdwg.mxu0
          %s1107 = scalar_lea.vmem [#allocation4], %s774
          %1108 = vst [vmem:[%s1107] sm:$0xff] %v1101
          %1109 = vst [vmem:[%s1107 + $0x8] sm:$0xff] %v1104
        $region136: #{mpn_encoder_forward.1} parent=95 // pred_fallthru
          _
        %p1110 = scmp.ge.s32.totalorder %s39, 1
        %p1111 = scmp.le.s32.totalorder %s39, 3
        %p1112 = pnand %p1110, %p1111
        %p1113 = pneg %p1112
        %p1114 = scmp.lt.s32.totalorder %s39, 0
        %s1115 = ssub.s32 0, %s39
        %s1116 = scalar_select %p1114, %s1115, %s39
        %s1117 = sand.u32 %s1116, 1
        %s1118 = ssub.s32 0, %s1117
        %s1119 = scalar_select %p1114, %s1118, %s1117
        %p1120 = scmp.ne.s32.totalorder %s1119, 0
        %p1121 = scmp.lt.s32.totalorder %s1119, 0
        %p1122 = pnand %p1121, %p1120
        %p1123 = pneg %p1122
        %s1124 = sadd.s32 %s1119, 2
        %s1125 = scalar_select %p1123, %s1124, %s1119
        %p1126 = scmp.eq.s32.totalorder %s1125, 1
        %p1127 = pnand %p1113, %p1126
        %p1128 = pneg %p1127
        // Predicated region
        $region137: #{mpn_encoder_forward.1} parent=95 // pred_check
          _
        $region138: #{mpn_encoder_forward.1} parent=95 // pred_check_branch
          %1130 = sbr.rel (%p1127) target = $region140
        $region139: #{mpn_encoder_forward.1} parent=95 // pred_region
          %v1131 = vld [vmem:[%s759] sm:$0xf]
          %v1132 = vld [vmem:[%s759 + $0x4] sm:$0xf]
          %v1133 = vunpack.c.l.bf16 %v1131
          %v1134 = vunpack.c.l.bf16 %v1132
          %v1135 = vld [vmem:[#allocation2] sm:$0xff]
          %v1136 = vld [vmem:[#allocation2 + $0x8] sm:$0xff]
          %v1137 = vld [vmem:[#allocation2 + $0x10] sm:$0xff]
          %v1138 = vld [vmem:[#allocation2 + $0x18] sm:$0xff]
          %vm1139 = vcmask 261120
          %v1141 = vsel %vm1139, %v1133, 0
          %v1144 = vsel %vm1139, %v1134, 0
          %1146 = vmatprep.subr.mxu0 0.0
          %1147 = vmatpush1.msra.mxu0 0.0
          %1148 = vmatprep.subr.mxu0 0.0
          %1149 = vmatpush1.msra.mxu0 0.0
          %1150 = vmatprep.subr.mxu0 0.0
          %1151 = vmatpush1.msra.mxu0 0.0
          %1152 = vmatprep.subr.mxu0 0.0
          %1153 = vmatpush1.msra.mxu0 0.0
          %1154 = vmatprep.subr.mxu0 0.0
          %1155 = vmatpush1.msra.mxu0 0.0
          %1156 = vmatprep.subr.mxu0 0.0
          %1157 = vmatpush1.msra.mxu0 0.0
          %1158 = vmatprep.subr.mxu0 0.0
          %1159 = vmatpush1.msra.mxu0 0.0
          %1160 = vmatprep.subr.mxu0 0.0
          %1161 = vmatpush1.msra.mxu0 0.0
          %1162 = vmatprep.subr.mxu0 0.0
          %1163 = vmatpush1.msra.mxu0 0.0
          %1164 = vmatprep.subr.mxu0 0.0
          %1165 = vmatpush1.msra.mxu0 0.0
          %1166 = vmatprep.subr.mxu0 0.0
          %1167 = vmatpush1.msra.mxu0 0.0
          %1168 = vmatprep.subr.mxu0 0.0
          %1169 = vmatpush1.msra.mxu0 0.0
          %1170 = vmatprep.subr.mxu0 0.0
          %1171 = vmatpush1.msra.mxu0 %v1138
          %1172 = vmatprep.subr.mxu0 0.0
          %1173 = vmatpush1.msra.mxu0 %v1137
          %1174 = vmatprep.subr.mxu0 0.0
          %1175 = vmatpush1.msra.mxu0 %v1136
          %1176 = vmatprep.subr.mxu0 0.0
          %1177 = vmatpush1.msra.mxu0 %v1135
          %1178 = vmatprep.subr.mxu0 0.0
          %1179 = vmatpush2.msra.mxu0 0.0
          %1180 = vmatprep.subr.mxu0 0.0
          %1181 = vmatpush2.msra.mxu0 0.0
          %1182 = vmatprep.subr.mxu0 0.0
          %1183 = vmatpush2.msra.mxu0 0.0
          %1184 = vmatprep.subr.mxu0 0.0
          %1185 = vmatpush2.msra.mxu0 0.0
          %1186 = vmatprep.subr.mxu0 0.0
          %1187 = vmatpush2.msra.mxu0 0.0
          %1188 = vmatprep.subr.mxu0 0.0
          %1189 = vmatpush2.msra.mxu0 0.0
          %1190 = vmatprep.subr.mxu0 0.0
          %1191 = vmatpush2.msra.mxu0 0.0
          %1192 = vmatprep.subr.mxu0 0.0
          %1193 = vmatpush2.msra.mxu0 0.0
          %1194 = vmatprep.subr.mxu0 0.0
          %1195 = vmatpush2.msra.mxu0 0.0
          %1196 = vmatprep.subr.mxu0 0.0
          %1197 = vmatpush2.msra.mxu0 0.0
          %1198 = vmatprep.subr.mxu0 0.0
          %1199 = vmatpush2.msra.mxu0 0.0
          %1200 = vmatprep.subr.mxu0 0.0
          %1201 = vmatpush2.msra.mxu0 0.0
          %1202 = vmatprep.subr.mxu0 0.0
          %1203 = vmatpush2.msra.mxu0 0.0
          %1204 = vmatprep.subr.mxu0 0.0
          %1205 = vmatpush2.msra.mxu0 0.0
          %1206 = vmatprep.subr.mxu0 0.0
          %1207 = vmatpush2.msra.mxu0 0.0
          %1208 = vmatprep.subr.mxu0 0.0
          %1209 = vmatpush2.msra.mxu0 0.0
          %1210 = vmatprep.mubr.f32.mxu0 0.0
          %1211 = vmatmul.mubr.f32.gmra.mxu0 %v1141
          %v1212 = vpop.f32.mrf.mxu0
          %v1213 = vadd.f32 0.0, %v1212
          %v1214 = vpop.f32.mrf.mxu0
          %1215 = vmatprep.mubr.f32.mxu0 0.0
          %1216 = vmatmul.mubr.f32.gmra.mxu0 %v1144
          %v1217 = vpop.f32.mrf.mxu0
          %v1218 = vadd.f32 0.0, %v1217
          %v1219 = vpop.f32.mrf.mxu0
          %1220 = vdwg.mxu0
          %v1221 = vmax.f32 %v1213, 0.0
          %v1222 = vmax.f32 %v1218, 0.0
          %v1223 = vpack.c.bf16 %v1222, %v1221
          %v1224 = vld [vmem:[%s7] sm:$0xf]
          %v1225 = vld [vmem:[%s7 + $0x4] sm:$0xf]
          %v1226 = vld [vmem:[%s7 + $0x8] sm:$0xf]
          %v1227 = vld [vmem:[%s7 + $0xc] sm:$0xf]
          %v1228 = vld [vmem:[%s7 + $0x10] sm:$0xf]
          %v1229 = vld [vmem:[%s7 + $0x14] sm:$0xf]
          %v1230 = vld [vmem:[%s7 + $0x18] sm:$0xf]
          %v1231 = vld [vmem:[%s7 + $0x1c] sm:$0xf]
          %v1232 = vld [vmem:[%s7 + $0x20] sm:$0xf]
          %v1233 = vld [vmem:[%s7 + $0x24] sm:$0xf]
          %v1234 = vld [vmem:[%s7 + $0x28] sm:$0xf]
          %v1235 = vld [vmem:[%s7 + $0x2c] sm:$0xf]
          %v1236 = vld [vmem:[%s7 + $0x30] sm:$0xf]
          %v1237 = vld [vmem:[%s7 + $0x34] sm:$0xf]
          %v1238 = vld [vmem:[%s7 + $0x38] sm:$0xf]
          %v1239 = vld [vmem:[%s7 + $0x3c] sm:$0xf]
          %s1240 = scalar_lea.vmem [#allocation4], %s774
          %v1241 = vld [vmem:[%s1240] sm:$0xff]
          %v1242 = vld [vmem:[%s1240 + $0x8] sm:$0xff]
          %v1259 = vunpack.c.l.b16 %v1224
          %v1260 = vunpack.c.l.b16 %v1225
          %v1261 = vunpack.c.l.b16 %v1226
          %v1262 = vunpack.c.l.b16 %v1227
          %v1263 = vunpack.c.l.b16 %v1228
          %v1264 = vunpack.c.l.b16 %v1229
          %v1265 = vunpack.c.l.b16 %v1230
          %v1266 = vunpack.c.l.b16 %v1231
          %v1267 = vunpack.c.l.b16 %v1232
          %v1268 = vunpack.c.l.b16 %v1233
          %v1269 = vunpack.c.l.b16 %v1234
          %v1270 = vunpack.c.l.b16 %v1235
          %v1271 = vunpack.c.l.b16 %v1236
          %v1272 = vunpack.c.l.b16 %v1237
          %v1273 = vunpack.c.l.b16 %v1238
          %v1274 = vunpack.c.l.b16 %v1239
          %v1275 = vpack.c.b16 %v1260, %v1259
          %v1276 = vpack.c.b16 %v1262, %v1261
          %v1277 = vpack.c.b16 %v1264, %v1263
          %v1278 = vpack.c.b16 %v1266, %v1265
          %v1279 = vpack.c.b16 %v1268, %v1267
          %v1280 = vpack.c.b16 %v1270, %v1269
          %v1281 = vpack.c.b16 %v1272, %v1271
          %v1282 = vpack.c.b16 %v1274, %v1273
          %1291 = vmatprep.subr.bf16.mxu0 0
          %1292 = vmatpush1.bf16.msra.mxu0 %v1282
          %1293 = vmatprep.subr.bf16.mxu0 0
          %1294 = vmatpush1.bf16.msra.mxu0 %v1281
          %1295 = vmatprep.subr.bf16.mxu0 0
          %1296 = vmatpush1.bf16.msra.mxu0 %v1280
          %1297 = vmatprep.subr.bf16.mxu0 0
          %1298 = vmatpush1.bf16.msra.mxu0 %v1279
          %1299 = vmatprep.subr.bf16.mxu0 0
          %1300 = vmatpush1.bf16.msra.mxu0 %v1278
          %1301 = vmatprep.subr.bf16.mxu0 0
          %1302 = vmatpush1.bf16.msra.mxu0 %v1277
          %1303 = vmatprep.subr.bf16.mxu0 0
          %1304 = vmatpush1.bf16.msra.mxu0 %v1276
          %1305 = vmatprep.subr.bf16.mxu0 0
          %1306 = vmatpush1.bf16.msra.mxu0 %v1275
          %1307 = vmatprep.subr.bf16.mxu0 0
          %1308 = vmatpush2.bf16.msra.mxu0 0
          %1309 = vmatprep.subr.bf16.mxu0 0
          %1310 = vmatpush2.bf16.msra.mxu0 0
          %1311 = vmatprep.subr.bf16.mxu0 0
          %1312 = vmatpush2.bf16.msra.mxu0 0
          %1313 = vmatprep.subr.bf16.mxu0 0
          %1314 = vmatpush2.bf16.msra.mxu0 0
          %1315 = vmatprep.subr.bf16.mxu0 0
          %1316 = vmatpush2.bf16.msra.mxu0 0
          %1317 = vmatprep.subr.bf16.mxu0 0
          %1318 = vmatpush2.bf16.msra.mxu0 0
          %1319 = vmatprep.subr.bf16.mxu0 0
          %1320 = vmatpush2.bf16.msra.mxu0 0
          %1321 = vmatprep.subr.bf16.mxu0 0
          %1322 = vmatpush2.bf16.msra.mxu0 0
          %1323 = vmatprep.mubr.bf16.mxu0 0
          %1324 = vmatmul.mubr.bf16.gmra.mxu0 %v1223
          %v1325 = vpop.f32.mrf.mxu0
          %v1326 = vadd.f32 %v1241, %v1325
          %v1327 = vpop.f32.mrf.mxu0
          %v1328 = vpop.f32.mrf.mxu0
          %v1329 = vadd.f32 %v1242, %v1328
          %v1330 = vpop.f32.mrf.mxu0
          %1331 = vdwg.mxu0
          %v1332 = vmax.f32 %v1326, 0.0
          %v1333 = vmax.f32 %v1329, 0.0
          %v1334 = vpack.c.bf16 %v1333, %v1332
          %v1335 = vld [vmem:[%s10] sm:$0xf]
          %v1336 = vld [vmem:[%s10 + $0x4] sm:$0xf]
          %v1337 = vld [vmem:[%s10 + $0x8] sm:$0xf]
          %v1338 = vld [vmem:[%s10 + $0xc] sm:$0xf]
          %v1339 = vld [vmem:[%s10 + $0x10] sm:$0xf]
          %v1340 = vld [vmem:[%s10 + $0x14] sm:$0xf]
          %v1341 = vld [vmem:[%s10 + $0x18] sm:$0xf]
          %v1342 = vld [vmem:[%s10 + $0x1c] sm:$0xf]
          %v1343 = vld [vmem:[%s10 + $0x20] sm:$0xf]
          %v1344 = vld [vmem:[%s10 + $0x24] sm:$0xf]
          %v1345 = vld [vmem:[%s10 + $0x28] sm:$0xf]
          %v1346 = vld [vmem:[%s10 + $0x2c] sm:$0xf]
          %v1347 = vld [vmem:[%s10 + $0x30] sm:$0xf]
          %v1348 = vld [vmem:[%s10 + $0x34] sm:$0xf]
          %v1349 = vld [vmem:[%s10 + $0x38] sm:$0xf]
          %v1350 = vld [vmem:[%s10 + $0x3c] sm:$0xf]
          %v1351 = vld [vmem:[#allocation9] sm:$0x1]
          %v1353 = vlaneseq
          %v1354 = vshrl.u32 %v1353, 7
          %v1355 = vsub.s32 0, %v1354
          %v1356 = vrot.slane %v1351, %v1355
          %v1374 = vunpack.c.l.b16 %v1335
          %v1375 = vunpack.c.l.b16 %v1336
          %v1376 = vunpack.c.l.b16 %v1337
          %v1377 = vunpack.c.l.b16 %v1338
          %v1378 = vunpack.c.l.b16 %v1339
          %v1379 = vunpack.c.l.b16 %v1340
          %v1380 = vunpack.c.l.b16 %v1341
          %v1381 = vunpack.c.l.b16 %v1342
          %v1382 = vunpack.c.l.b16 %v1343
          %v1383 = vunpack.c.l.b16 %v1344
          %v1384 = vunpack.c.l.b16 %v1345
          %v1385 = vunpack.c.l.b16 %v1346
          %v1386 = vunpack.c.l.b16 %v1347
          %v1387 = vunpack.c.l.b16 %v1348
          %v1388 = vunpack.c.l.b16 %v1349
          %v1389 = vunpack.c.l.b16 %v1350
          %v1390 = vpack.c.b16 %v1375, %v1374
          %v1391 = vpack.c.b16 %v1377, %v1376
          %v1392 = vpack.c.b16 %v1379, %v1378
          %v1393 = vpack.c.b16 %v1381, %v1380
          %v1394 = vpack.c.b16 %v1383, %v1382
          %v1395 = vpack.c.b16 %v1385, %v1384
          %v1396 = vpack.c.b16 %v1387, %v1386
          %v1397 = vpack.c.b16 %v1389, %v1388
          %1406 = vmatprep.subr.bf16.mxu0 0
          %1407 = vmatpush1.bf16.msra.mxu0 %v1397
          %1408 = vmatprep.subr.bf16.mxu0 0
          %1409 = vmatpush1.bf16.msra.mxu0 %v1396
          %1410 = vmatprep.subr.bf16.mxu0 0
          %1411 = vmatpush1.bf16.msra.mxu0 %v1395
          %1412 = vmatprep.subr.bf16.mxu0 0
          %1413 = vmatpush1.bf16.msra.mxu0 %v1394
          %1414 = vmatprep.subr.bf16.mxu0 0
          %1415 = vmatpush1.bf16.msra.mxu0 %v1393
          %1416 = vmatprep.subr.bf16.mxu0 0
          %1417 = vmatpush1.bf16.msra.mxu0 %v1392
          %1418 = vmatprep.subr.bf16.mxu0 0
          %1419 = vmatpush1.bf16.msra.mxu0 %v1391
          %1420 = vmatprep.subr.bf16.mxu0 0
          %1421 = vmatpush1.bf16.msra.mxu0 %v1390
          %1422 = vmatprep.subr.bf16.mxu0 0
          %1423 = vmatpush2.bf16.msra.mxu0 0
          %1424 = vmatprep.subr.bf16.mxu0 0
          %1425 = vmatpush2.bf16.msra.mxu0 0
          %1426 = vmatprep.subr.bf16.mxu0 0
          %1427 = vmatpush2.bf16.msra.mxu0 0
          %1428 = vmatprep.subr.bf16.mxu0 0
          %1429 = vmatpush2.bf16.msra.mxu0 0
          %1430 = vmatprep.subr.bf16.mxu0 0
          %1431 = vmatpush2.bf16.msra.mxu0 0
          %1432 = vmatprep.subr.bf16.mxu0 0
          %1433 = vmatpush2.bf16.msra.mxu0 0
          %1434 = vmatprep.subr.bf16.mxu0 0
          %1435 = vmatpush2.bf16.msra.mxu0 0
          %1436 = vmatprep.subr.bf16.mxu0 0
          %1437 = vmatpush2.bf16.msra.mxu0 0
          %1438 = vmatprep.mubr.bf16.mxu0 0
          %1439 = vmatmul.mubr.bf16.gmra.mxu0 %v1334
          %v1440 = vpop.f32.mrf.mxu0
          %v1441 = vadd.f32 %v1356, %v1440
          %v1442 = vpop.f32.mrf.mxu0
          %v1443 = vpop.f32.mrf.mxu0
          %v1444 = vadd.f32 %v1356, %v1443
          %v1445 = vpop.f32.mrf.mxu0
          %1446 = vdwg.mxu0
          %s1447 = scalar_lea.vmem [#allocation2], %s774
          %v1448 = vld [vmem:[%s1447] sm:$0xff]
          %v1449 = vld [vmem:[%s1447 + $0x8] sm:$0xff]
          %v1450 = vadd.f32 %v1448, %v1441
          %v1451 = vadd.f32 %v1449, %v1444
          %v1452 = vmul.f32 %v1450, %v785
          %v1453 = vmul.f32 %v1451, %v786
          %s1454 = scalar_lea.vmem [#allocation3], %s774
          %1455 = vst [vmem:[%s1454] sm:$0xff] %v1452
          %1456 = vst [vmem:[%s1454 + $0x8] sm:$0xff] %v1453
        $region140: #{mpn_encoder_forward.1} parent=95 // pred_fallthru
          _
        %p1457 = scmp.eq.s32.totalorder %s1125, 0
        %p1458 = pnand %p1113, %p1457
        %p1459 = pneg %p1458
        // Predicated region
        $region141: #{mpn_encoder_forward.1} parent=95 // pred_check
          _
        $region142: #{mpn_encoder_forward.1} parent=95 // pred_check_branch
          %1461 = sbr.rel (%p1458) target = $region144
        $region143: #{mpn_encoder_forward.1} parent=95 // pred_region
          %v1462 = vld [vmem:[%s759] sm:$0xf]
          %v1463 = vld [vmem:[%s759 + $0x4] sm:$0xf]
          %v1464 = vunpack.c.l.bf16 %v1462
          %v1465 = vunpack.c.l.bf16 %v1463
          %v1466 = vld [vmem:[#allocation3] sm:$0xff]
          %v1467 = vld [vmem:[#allocation3 + $0x8] sm:$0xff]
          %v1468 = vld [vmem:[#allocation3 + $0x10] sm:$0xff]
          %v1469 = vld [vmem:[#allocation3 + $0x18] sm:$0xff]
          %vm1470 = vcmask 261120
          %v1472 = vsel %vm1470, %v1464, 0
          %v1475 = vsel %vm1470, %v1465, 0
          %1477 = vmatprep.subr.mxu0 0.0
          %1478 = vmatpush1.msra.mxu0 0.0
          %1479 = vmatprep.subr.mxu0 0.0
          %1480 = vmatpush1.msra.mxu0 0.0
          %1481 = vmatprep.subr.mxu0 0.0
          %1482 = vmatpush1.msra.mxu0 0.0
          %1483 = vmatprep.subr.mxu0 0.0
          %1484 = vmatpush1.msra.mxu0 0.0
          %1485 = vmatprep.subr.mxu0 0.0
          %1486 = vmatpush1.msra.mxu0 0.0
          %1487 = vmatprep.subr.mxu0 0.0
          %1488 = vmatpush1.msra.mxu0 0.0
          %1489 = vmatprep.subr.mxu0 0.0
          %1490 = vmatpush1.msra.mxu0 0.0
          %1491 = vmatprep.subr.mxu0 0.0
          %1492 = vmatpush1.msra.mxu0 0.0
          %1493 = vmatprep.subr.mxu0 0.0
          %1494 = vmatpush1.msra.mxu0 0.0
          %1495 = vmatprep.subr.mxu0 0.0
          %1496 = vmatpush1.msra.mxu0 0.0
          %1497 = vmatprep.subr.mxu0 0.0
          %1498 = vmatpush1.msra.mxu0 0.0
          %1499 = vmatprep.subr.mxu0 0.0
          %1500 = vmatpush1.msra.mxu0 0.0
          %1501 = vmatprep.subr.mxu0 0.0
          %1502 = vmatpush1.msra.mxu0 %v1469
          %1503 = vmatprep.subr.mxu0 0.0
          %1504 = vmatpush1.msra.mxu0 %v1468
          %1505 = vmatprep.subr.mxu0 0.0
          %1506 = vmatpush1.msra.mxu0 %v1467
          %1507 = vmatprep.subr.mxu0 0.0
          %1508 = vmatpush1.msra.mxu0 %v1466
          %1509 = vmatprep.subr.mxu0 0.0
          %1510 = vmatpush2.msra.mxu0 0.0
          %1511 = vmatprep.subr.mxu0 0.0
          %1512 = vmatpush2.msra.mxu0 0.0
          %1513 = vmatprep.subr.mxu0 0.0
          %1514 = vmatpush2.msra.mxu0 0.0
          %1515 = vmatprep.subr.mxu0 0.0
          %1516 = vmatpush2.msra.mxu0 0.0
          %1517 = vmatprep.subr.mxu0 0.0
          %1518 = vmatpush2.msra.mxu0 0.0
          %1519 = vmatprep.subr.mxu0 0.0
          %1520 = vmatpush2.msra.mxu0 0.0
          %1521 = vmatprep.subr.mxu0 0.0
          %1522 = vmatpush2.msra.mxu0 0.0
          %1523 = vmatprep.subr.mxu0 0.0
          %1524 = vmatpush2.msra.mxu0 0.0
          %1525 = vmatprep.subr.mxu0 0.0
          %1526 = vmatpush2.msra.mxu0 0.0
          %1527 = vmatprep.subr.mxu0 0.0
          %1528 = vmatpush2.msra.mxu0 0.0
          %1529 = vmatprep.subr.mxu0 0.0
          %1530 = vmatpush2.msra.mxu0 0.0
          %1531 = vmatprep.subr.mxu0 0.0
          %1532 = vmatpush2.msra.mxu0 0.0
          %1533 = vmatprep.subr.mxu0 0.0
          %1534 = vmatpush2.msra.mxu0 0.0
          %1535 = vmatprep.subr.mxu0 0.0
          %1536 = vmatpush2.msra.mxu0 0.0
          %1537 = vmatprep.subr.mxu0 0.0
          %1538 = vmatpush2.msra.mxu0 0.0
          %1539 = vmatprep.subr.mxu0 0.0
          %1540 = vmatpush2.msra.mxu0 0.0
          %1541 = vmatprep.mubr.f32.mxu0 0.0
          %1542 = vmatmul.mubr.f32.gmra.mxu0 %v1472
          %v1543 = vpop.f32.mrf.mxu0
          %v1544 = vadd.f32 0.0, %v1543
          %v1545 = vpop.f32.mrf.mxu0
          %1546 = vmatprep.mubr.f32.mxu0 0.0
          %1547 = vmatmul.mubr.f32.gmra.mxu0 %v1475
          %v1548 = vpop.f32.mrf.mxu0
          %v1549 = vadd.f32 0.0, %v1548
          %v1550 = vpop.f32.mrf.mxu0
          %1551 = vdwg.mxu0
          %v1552 = vmax.f32 %v1544, 0.0
          %v1553 = vmax.f32 %v1549, 0.0
          %v1554 = vpack.c.bf16 %v1553, %v1552
          %v1555 = vld [vmem:[%s7] sm:$0xf]
          %v1556 = vld [vmem:[%s7 + $0x4] sm:$0xf]
          %v1557 = vld [vmem:[%s7 + $0x8] sm:$0xf]
          %v1558 = vld [vmem:[%s7 + $0xc] sm:$0xf]
          %v1559 = vld [vmem:[%s7 + $0x10] sm:$0xf]
          %v1560 = vld [vmem:[%s7 + $0x14] sm:$0xf]
          %v1561 = vld [vmem:[%s7 + $0x18] sm:$0xf]
          %v1562 = vld [vmem:[%s7 + $0x1c] sm:$0xf]
          %v1563 = vld [vmem:[%s7 + $0x20] sm:$0xf]
          %v1564 = vld [vmem:[%s7 + $0x24] sm:$0xf]
          %v1565 = vld [vmem:[%s7 + $0x28] sm:$0xf]
          %v1566 = vld [vmem:[%s7 + $0x2c] sm:$0xf]
          %v1567 = vld [vmem:[%s7 + $0x30] sm:$0xf]
          %v1568 = vld [vmem:[%s7 + $0x34] sm:$0xf]
          %v1569 = vld [vmem:[%s7 + $0x38] sm:$0xf]
          %v1570 = vld [vmem:[%s7 + $0x3c] sm:$0xf]
          %s1571 = scalar_lea.vmem [#allocation4], %s774
          %v1572 = vld [vmem:[%s1571] sm:$0xff]
          %v1573 = vld [vmem:[%s1571 + $0x8] sm:$0xff]
          %v1590 = vunpack.c.l.b16 %v1555
          %v1591 = vunpack.c.l.b16 %v1556
          %v1592 = vunpack.c.l.b16 %v1557
          %v1593 = vunpack.c.l.b16 %v1558
          %v1594 = vunpack.c.l.b16 %v1559
          %v1595 = vunpack.c.l.b16 %v1560
          %v1596 = vunpack.c.l.b16 %v1561
          %v1597 = vunpack.c.l.b16 %v1562
          %v1598 = vunpack.c.l.b16 %v1563
          %v1599 = vunpack.c.l.b16 %v1564
          %v1600 = vunpack.c.l.b16 %v1565
          %v1601 = vunpack.c.l.b16 %v1566
          %v1602 = vunpack.c.l.b16 %v1567
          %v1603 = vunpack.c.l.b16 %v1568
          %v1604 = vunpack.c.l.b16 %v1569
          %v1605 = vunpack.c.l.b16 %v1570
          %v1606 = vpack.c.b16 %v1591, %v1590
          %v1607 = vpack.c.b16 %v1593, %v1592
          %v1608 = vpack.c.b16 %v1595, %v1594
          %v1609 = vpack.c.b16 %v1597, %v1596
          %v1610 = vpack.c.b16 %v1599, %v1598
          %v1611 = vpack.c.b16 %v1601, %v1600
          %v1612 = vpack.c.b16 %v1603, %v1602
          %v1613 = vpack.c.b16 %v1605, %v1604
          %1622 = vmatprep.subr.bf16.mxu0 0
          %1623 = vmatpush1.bf16.msra.mxu0 %v1613
          %1624 = vmatprep.subr.bf16.mxu0 0
          %1625 = vmatpush1.bf16.msra.mxu0 %v1612
          %1626 = vmatprep.subr.bf16.mxu0 0
          %1627 = vmatpush1.bf16.msra.mxu0 %v1611
          %1628 = vmatprep.subr.bf16.mxu0 0
          %1629 = vmatpush1.bf16.msra.mxu0 %v1610
          %1630 = vmatprep.subr.bf16.mxu0 0
          %1631 = vmatpush1.bf16.msra.mxu0 %v1609
          %1632 = vmatprep.subr.bf16.mxu0 0
          %1633 = vmatpush1.bf16.msra.mxu0 %v1608
          %1634 = vmatprep.subr.bf16.mxu0 0
          %1635 = vmatpush1.bf16.msra.mxu0 %v1607
          %1636 = vmatprep.subr.bf16.mxu0 0
          %1637 = vmatpush1.bf16.msra.mxu0 %v1606
          %1638 = vmatprep.subr.bf16.mxu0 0
          %1639 = vmatpush2.bf16.msra.mxu0 0
          %1640 = vmatprep.subr.bf16.mxu0 0
          %1641 = vmatpush2.bf16.msra.mxu0 0
          %1642 = vmatprep.subr.bf16.mxu0 0
          %1643 = vmatpush2.bf16.msra.mxu0 0
          %1644 = vmatprep.subr.bf16.mxu0 0
          %1645 = vmatpush2.bf16.msra.mxu0 0
          %1646 = vmatprep.subr.bf16.mxu0 0
          %1647 = vmatpush2.bf16.msra.mxu0 0
          %1648 = vmatprep.subr.bf16.mxu0 0
          %1649 = vmatpush2.bf16.msra.mxu0 0
          %1650 = vmatprep.subr.bf16.mxu0 0
          %1651 = vmatpush2.bf16.msra.mxu0 0
          %1652 = vmatprep.subr.bf16.mxu0 0
          %1653 = vmatpush2.bf16.msra.mxu0 0
          %1654 = vmatprep.mubr.bf16.mxu0 0
          %1655 = vmatmul.mubr.bf16.gmra.mxu0 %v1554
          %v1656 = vpop.f32.mrf.mxu0
          %v1657 = vadd.f32 %v1572, %v1656
          %v1658 = vpop.f32.mrf.mxu0
          %v1659 = vpop.f32.mrf.mxu0
          %v1660 = vadd.f32 %v1573, %v1659
          %v1661 = vpop.f32.mrf.mxu0
          %1662 = vdwg.mxu0
          %v1663 = vmax.f32 %v1657, 0.0
          %v1664 = vmax.f32 %v1660, 0.0
          %v1665 = vpack.c.bf16 %v1664, %v1663
          %v1666 = vld [vmem:[%s10] sm:$0xf]
          %v1667 = vld [vmem:[%s10 + $0x4] sm:$0xf]
          %v1668 = vld [vmem:[%s10 + $0x8] sm:$0xf]
          %v1669 = vld [vmem:[%s10 + $0xc] sm:$0xf]
          %v1670 = vld [vmem:[%s10 + $0x10] sm:$0xf]
          %v1671 = vld [vmem:[%s10 + $0x14] sm:$0xf]
          %v1672 = vld [vmem:[%s10 + $0x18] sm:$0xf]
          %v1673 = vld [vmem:[%s10 + $0x1c] sm:$0xf]
          %v1674 = vld [vmem:[%s10 + $0x20] sm:$0xf]
          %v1675 = vld [vmem:[%s10 + $0x24] sm:$0xf]
          %v1676 = vld [vmem:[%s10 + $0x28] sm:$0xf]
          %v1677 = vld [vmem:[%s10 + $0x2c] sm:$0xf]
          %v1678 = vld [vmem:[%s10 + $0x30] sm:$0xf]
          %v1679 = vld [vmem:[%s10 + $0x34] sm:$0xf]
          %v1680 = vld [vmem:[%s10 + $0x38] sm:$0xf]
          %v1681 = vld [vmem:[%s10 + $0x3c] sm:$0xf]
          %v1682 = vld [vmem:[#allocation9] sm:$0x1]
          %v1684 = vlaneseq
          %v1685 = vshrl.u32 %v1684, 7
          %v1686 = vsub.s32 0, %v1685
          %v1687 = vrot.slane %v1682, %v1686
          %v1705 = vunpack.c.l.b16 %v1666
          %v1706 = vunpack.c.l.b16 %v1667
          %v1707 = vunpack.c.l.b16 %v1668
          %v1708 = vunpack.c.l.b16 %v1669
          %v1709 = vunpack.c.l.b16 %v1670
          %v1710 = vunpack.c.l.b16 %v1671
          %v1711 = vunpack.c.l.b16 %v1672
          %v1712 = vunpack.c.l.b16 %v1673
          %v1713 = vunpack.c.l.b16 %v1674
          %v1714 = vunpack.c.l.b16 %v1675
          %v1715 = vunpack.c.l.b16 %v1676
          %v1716 = vunpack.c.l.b16 %v1677
          %v1717 = vunpack.c.l.b16 %v1678
          %v1718 = vunpack.c.l.b16 %v1679
          %v1719 = vunpack.c.l.b16 %v1680
          %v1720 = vunpack.c.l.b16 %v1681
          %v1721 = vpack.c.b16 %v1706, %v1705
          %v1722 = vpack.c.b16 %v1708, %v1707
          %v1723 = vpack.c.b16 %v1710, %v1709
          %v1724 = vpack.c.b16 %v1712, %v1711
          %v1725 = vpack.c.b16 %v1714, %v1713
          %v1726 = vpack.c.b16 %v1716, %v1715
          %v1727 = vpack.c.b16 %v1718, %v1717
          %v1728 = vpack.c.b16 %v1720, %v1719
          %1737 = vmatprep.subr.bf16.mxu0 0
          %1738 = vmatpush1.bf16.msra.mxu0 %v1728
          %1739 = vmatprep.subr.bf16.mxu0 0
          %1740 = vmatpush1.bf16.msra.mxu0 %v1727
          %1741 = vmatprep.subr.bf16.mxu0 0
          %1742 = vmatpush1.bf16.msra.mxu0 %v1726
          %1743 = vmatprep.subr.bf16.mxu0 0
          %1744 = vmatpush1.bf16.msra.mxu0 %v1725
          %1745 = vmatprep.subr.bf16.mxu0 0
          %1746 = vmatpush1.bf16.msra.mxu0 %v1724
          %1747 = vmatprep.subr.bf16.mxu0 0
          %1748 = vmatpush1.bf16.msra.mxu0 %v1723
          %1749 = vmatprep.subr.bf16.mxu0 0
          %1750 = vmatpush1.bf16.msra.mxu0 %v1722
          %1751 = vmatprep.subr.bf16.mxu0 0
          %1752 = vmatpush1.bf16.msra.mxu0 %v1721
          %1753 = vmatprep.subr.bf16.mxu0 0
          %1754 = vmatpush2.bf16.msra.mxu0 0
          %1755 = vmatprep.subr.bf16.mxu0 0
          %1756 = vmatpush2.bf16.msra.mxu0 0
          %1757 = vmatprep.subr.bf16.mxu0 0
          %1758 = vmatpush2.bf16.msra.mxu0 0
          %1759 = vmatprep.subr.bf16.mxu0 0
          %1760 = vmatpush2.bf16.msra.mxu0 0
          %1761 = vmatprep.subr.bf16.mxu0 0
          %1762 = vmatpush2.bf16.msra.mxu0 0
          %1763 = vmatprep.subr.bf16.mxu0 0
          %1764 = vmatpush2.bf16.msra.mxu0 0
          %1765 = vmatprep.subr.bf16.mxu0 0
          %1766 = vmatpush2.bf16.msra.mxu0 0
          %1767 = vmatprep.subr.bf16.mxu0 0
          %1768 = vmatpush2.bf16.msra.mxu0 0
          %1769 = vmatprep.mubr.bf16.mxu0 0
          %1770 = vmatmul.mubr.bf16.gmra.mxu0 %v1665
          %v1771 = vpop.f32.mrf.mxu0
          %v1772 = vadd.f32 %v1687, %v1771
          %v1773 = vpop.f32.mrf.mxu0
          %v1774 = vpop.f32.mrf.mxu0
          %v1775 = vadd.f32 %v1687, %v1774
          %v1776 = vpop.f32.mrf.mxu0
          %1777 = vdwg.mxu0
          %s1778 = scalar_lea.vmem [#allocation3], %s774
          %v1779 = vld [vmem:[%s1778] sm:$0xff]
          %v1780 = vld [vmem:[%s1778 + $0x8] sm:$0xff]
          %v1781 = vadd.f32 %v1779, %v1772
          %v1782 = vadd.f32 %v1780, %v1775
          %v1783 = vmul.f32 %v1781, %v785
          %v1784 = vmul.f32 %v1782, %v786
          %s1785 = scalar_lea.vmem [#allocation2], %s774
          %1786 = vst [vmem:[%s1785] sm:$0xff] %v1783
          %1787 = vst [vmem:[%s1785 + $0x8] sm:$0xff] %v1784
        $region144: #{mpn_encoder_forward.1} parent=95 // pred_fallthru
          _
        %p1788 = scmp.eq.s32.totalorder %s39, 4
        // Predicated region
        $region145: #{mpn_encoder_forward.1} parent=95 // pred_check
          %p1789 = pneg %p1788
        $region146: #{mpn_encoder_forward.1} parent=95 // pred_check_branch
          %1791 = sbr.rel (%p1789) target = $region148
        $region147: #{mpn_encoder_forward.1} parent=95 // pred_region
          %v1792 = vld [vmem:[%s759] sm:$0xf]
          %v1793 = vld [vmem:[%s759 + $0x4] sm:$0xf]
          %v1794 = vunpack.c.l.bf16 %v1792
          %v1795 = vunpack.c.l.bf16 %v1793
          %v1796 = vld [vmem:[#allocation3] sm:$0xff]
          %v1797 = vld [vmem:[#allocation3 + $0x8] sm:$0xff]
          %v1798 = vld [vmem:[#allocation3 + $0x10] sm:$0xff]
          %v1799 = vld [vmem:[#allocation3 + $0x18] sm:$0xff]
          %vm1800 = vcmask 261120
          %v1802 = vsel %vm1800, %v1794, 0
          %v1805 = vsel %vm1800, %v1795, 0
          %1807 = vmatprep.subr.mxu0 0.0
          %1808 = vmatpush1.msra.mxu0 0.0
          %1809 = vmatprep.subr.mxu0 0.0
          %1810 = vmatpush1.msra.mxu0 0.0
          %1811 = vmatprep.subr.mxu0 0.0
          %1812 = vmatpush1.msra.mxu0 0.0
          %1813 = vmatprep.subr.mxu0 0.0
          %1814 = vmatpush1.msra.mxu0 0.0
          %1815 = vmatprep.subr.mxu0 0.0
          %1816 = vmatpush1.msra.mxu0 0.0
          %1817 = vmatprep.subr.mxu0 0.0
          %1818 = vmatpush1.msra.mxu0 0.0
          %1819 = vmatprep.subr.mxu0 0.0
          %1820 = vmatpush1.msra.mxu0 0.0
          %1821 = vmatprep.subr.mxu0 0.0
          %1822 = vmatpush1.msra.mxu0 0.0
          %1823 = vmatprep.subr.mxu0 0.0
          %1824 = vmatpush1.msra.mxu0 0.0
          %1825 = vmatprep.subr.mxu0 0.0
          %1826 = vmatpush1.msra.mxu0 0.0
          %1827 = vmatprep.subr.mxu0 0.0
          %1828 = vmatpush1.msra.mxu0 0.0
          %1829 = vmatprep.subr.mxu0 0.0
          %1830 = vmatpush1.msra.mxu0 0.0
          %1831 = vmatprep.subr.mxu0 0.0
          %1832 = vmatpush1.msra.mxu0 %v1799
          %1833 = vmatprep.subr.mxu0 0.0
          %1834 = vmatpush1.msra.mxu0 %v1798
          %1835 = vmatprep.subr.mxu0 0.0
          %1836 = vmatpush1.msra.mxu0 %v1797
          %1837 = vmatprep.subr.mxu0 0.0
          %1838 = vmatpush1.msra.mxu0 %v1796
          %1839 = vmatprep.subr.mxu0 0.0
          %1840 = vmatpush2.msra.mxu0 0.0
          %1841 = vmatprep.subr.mxu0 0.0
          %1842 = vmatpush2.msra.mxu0 0.0
          %1843 = vmatprep.subr.mxu0 0.0
          %1844 = vmatpush2.msra.mxu0 0.0
          %1845 = vmatprep.subr.mxu0 0.0
          %1846 = vmatpush2.msra.mxu0 0.0
          %1847 = vmatprep.subr.mxu0 0.0
          %1848 = vmatpush2.msra.mxu0 0.0
          %1849 = vmatprep.subr.mxu0 0.0
          %1850 = vmatpush2.msra.mxu0 0.0
          %1851 = vmatprep.subr.mxu0 0.0
          %1852 = vmatpush2.msra.mxu0 0.0
          %1853 = vmatprep.subr.mxu0 0.0
          %1854 = vmatpush2.msra.mxu0 0.0
          %1855 = vmatprep.subr.mxu0 0.0
          %1856 = vmatpush2.msra.mxu0 0.0
          %1857 = vmatprep.subr.mxu0 0.0
          %1858 = vmatpush2.msra.mxu0 0.0
          %1859 = vmatprep.subr.mxu0 0.0
          %1860 = vmatpush2.msra.mxu0 0.0
          %1861 = vmatprep.subr.mxu0 0.0
          %1862 = vmatpush2.msra.mxu0 0.0
          %1863 = vmatprep.subr.mxu0 0.0
          %1864 = vmatpush2.msra.mxu0 0.0
          %1865 = vmatprep.subr.mxu0 0.0
          %1866 = vmatpush2.msra.mxu0 0.0
          %1867 = vmatprep.subr.mxu0 0.0
          %1868 = vmatpush2.msra.mxu0 0.0
          %1869 = vmatprep.subr.mxu0 0.0
          %1870 = vmatpush2.msra.mxu0 0.0
          %1871 = vmatprep.mubr.f32.mxu0 0.0
          %1872 = vmatmul.mubr.f32.gmra.mxu0 %v1802
          %v1873 = vpop.f32.mrf.mxu0
          %v1874 = vadd.f32 0.0, %v1873
          %v1875 = vpop.f32.mrf.mxu0
          %1876 = vmatprep.mubr.f32.mxu0 0.0
          %1877 = vmatmul.mubr.f32.gmra.mxu0 %v1805
          %v1878 = vpop.f32.mrf.mxu0
          %v1879 = vadd.f32 0.0, %v1878
          %v1880 = vpop.f32.mrf.mxu0
          %1881 = vdwg.mxu0
          %v1882 = vld [vmem:[%s753] sm:$0xf]
          %v1883 = vld [vmem:[%s753 + $0x4] sm:$0xf]
          %v1884 = vld [vmem:[%s12] sm:$0xf]
          %v1885 = vld [vmem:[%s12 + $0x4] sm:$0xf]
          %v1886 = vld [vmem:[%s12 + $0x8] sm:$0xf]
          %v1887 = vld [vmem:[%s12 + $0xc] sm:$0xf]
          %v1888 = vld [vmem:[%s12 + $0x10] sm:$0xf]
          %v1889 = vld [vmem:[%s12 + $0x14] sm:$0xf]
          %v1890 = vld [vmem:[%s12 + $0x18] sm:$0xf]
          %v1891 = vld [vmem:[%s12 + $0x1c] sm:$0xf]
          %v1892 = vld [vmem:[%s12 + $0x20] sm:$0xf]
          %v1893 = vld [vmem:[%s12 + $0x24] sm:$0xf]
          %v1894 = vld [vmem:[%s12 + $0x28] sm:$0xf]
          %v1895 = vld [vmem:[%s12 + $0x2c] sm:$0xf]
          %v1896 = vld [vmem:[%s12 + $0x30] sm:$0xf]
          %v1897 = vld [vmem:[%s12 + $0x34] sm:$0xf]
          %v1898 = vld [vmem:[%s12 + $0x38] sm:$0xf]
          %v1899 = vld [vmem:[%s12 + $0x3c] sm:$0xf]
          %v1900 = vld [vmem:[#allocation10] sm:$0x1]
          %v1902 = vlaneseq
          %v1903 = vshrl.u32 %v1902, 7
          %v1904 = vsub.s32 0, %v1903
          %v1905 = vrot.slane %v1900, %v1904
          %v1909 = vunpack.c.l.b16 %v1882
          %v1910 = vunpack.c.l.b16 %v1883
          %v1911 = vpack.c.b16 %v1910, %v1909
          %v1929 = vunpack.c.l.b16 %v1884
          %v1930 = vunpack.c.l.b16 %v1885
          %v1931 = vunpack.c.l.b16 %v1886
          %v1932 = vunpack.c.l.b16 %v1887
          %v1933 = vunpack.c.l.b16 %v1888
          %v1934 = vunpack.c.l.b16 %v1889
          %v1935 = vunpack.c.l.b16 %v1890
          %v1936 = vunpack.c.l.b16 %v1891
          %v1937 = vunpack.c.l.b16 %v1892
          %v1938 = vunpack.c.l.b16 %v1893
          %v1939 = vunpack.c.l.b16 %v1894
          %v1940 = vunpack.c.l.b16 %v1895
          %v1941 = vunpack.c.l.b16 %v1896
          %v1942 = vunpack.c.l.b16 %v1897
          %v1943 = vunpack.c.l.b16 %v1898
          %v1944 = vunpack.c.l.b16 %v1899
          %v1945 = vpack.c.b16 %v1930, %v1929
          %v1946 = vpack.c.b16 %v1932, %v1931
          %v1947 = vpack.c.b16 %v1934, %v1933
          %v1948 = vpack.c.b16 %v1936, %v1935
          %v1949 = vpack.c.b16 %v1938, %v1937
          %v1950 = vpack.c.b16 %v1940, %v1939
          %v1951 = vpack.c.b16 %v1942, %v1941
          %v1952 = vpack.c.b16 %v1944, %v1943
          %1961 = vmatprep.subr.bf16.mxu0 0
          %1962 = vmatpush1.bf16.msra.mxu0 %v1952
          %1963 = vmatprep.subr.bf16.mxu0 0
          %1964 = vmatpush1.bf16.msra.mxu0 %v1951
          %1965 = vmatprep.subr.bf16.mxu0 0
          %1966 = vmatpush1.bf16.msra.mxu0 %v1950
          %1967 = vmatprep.subr.bf16.mxu0 0
          %1968 = vmatpush1.bf16.msra.mxu0 %v1949
          %1969 = vmatprep.subr.bf16.mxu0 0
          %1970 = vmatpush1.bf16.msra.mxu0 %v1948
          %1971 = vmatprep.subr.bf16.mxu0 0
          %1972 = vmatpush1.bf16.msra.mxu0 %v1947
          %1973 = vmatprep.subr.bf16.mxu0 0
          %1974 = vmatpush1.bf16.msra.mxu0 %v1946
          %1975 = vmatprep.subr.bf16.mxu0 0
          %1976 = vmatpush1.bf16.msra.mxu0 %v1945
          %1977 = vmatprep.subr.bf16.mxu0 0
          %1978 = vmatpush2.bf16.msra.mxu0 0
          %1979 = vmatprep.subr.bf16.mxu0 0
          %1980 = vmatpush2.bf16.msra.mxu0 0
          %1981 = vmatprep.subr.bf16.mxu0 0
          %1982 = vmatpush2.bf16.msra.mxu0 0
          %1983 = vmatprep.subr.bf16.mxu0 0
          %1984 = vmatpush2.bf16.msra.mxu0 0
          %1985 = vmatprep.subr.bf16.mxu0 0
          %1986 = vmatpush2.bf16.msra.mxu0 0
          %1987 = vmatprep.subr.bf16.mxu0 0
          %1988 = vmatpush2.bf16.msra.mxu0 0
          %1989 = vmatprep.subr.bf16.mxu0 0
          %1990 = vmatpush2.bf16.msra.mxu0 0
          %1991 = vmatprep.subr.bf16.mxu0 0
          %1992 = vmatpush2.bf16.msra.mxu0 0
          %1993 = vmatprep.mubr.bf16.mxu0 0
          %1994 = vmatmul.mubr.bf16.gmra.mxu0 %v1911
          %v1995 = vpop.f32.mrf.mxu0
          %v1996 = vadd.f32 %v1905, %v1995
          %v1997 = vpop.f32.mrf.mxu0
          %v1998 = vpop.f32.mrf.mxu0
          %v1999 = vadd.f32 %v1905, %v1998
          %v2000 = vpop.f32.mrf.mxu0
          %2001 = vdwg.mxu0
          %v2002 = vmax.f32 %v1996, 0.0
          %v2003 = vmax.f32 %v1999, 0.0
          %v2004 = vpack.c.bf16 %v2003, %v2002
          %v2005 = vld [vmem:[#allocation12] sm:$0xf]
          %v2006 = vld [vmem:[#allocation12 + $0x4] sm:$0xf]
          %v2007 = vld [vmem:[#allocation12 + $0x8] sm:$0xf]
          %v2008 = vld [vmem:[#allocation12 + $0xc] sm:$0xf]
          %v2009 = vld [vmem:[#allocation12 + $0x10] sm:$0xf]
          %v2010 = vld [vmem:[#allocation12 + $0x14] sm:$0xf]
          %v2011 = vld [vmem:[#allocation12 + $0x18] sm:$0xf]
          %v2012 = vld [vmem:[#allocation12 + $0x1c] sm:$0xf]
          %v2013 = vld [vmem:[#allocation12 + $0x20] sm:$0xf]
          %v2014 = vld [vmem:[#allocation12 + $0x24] sm:$0xf]
          %v2015 = vld [vmem:[#allocation12 + $0x28] sm:$0xf]
          %v2016 = vld [vmem:[#allocation12 + $0x2c] sm:$0xf]
          %v2017 = vld [vmem:[#allocation12 + $0x30] sm:$0xf]
          %v2018 = vld [vmem:[#allocation12 + $0x34] sm:$0xf]
          %v2019 = vld [vmem:[#allocation12 + $0x38] sm:$0xf]
          %v2020 = vld [vmem:[#allocation12 + $0x3c] sm:$0xf]
          %v2021 = vld [vmem:[#allocation13] sm:$0x1]
          %v2023 = vlaneseq
          %v2024 = vshrl.u32 %v2023, 7
          %v2025 = vsub.s32 0, %v2024
          %v2026 = vrot.slane %v2021, %v2025
          %v2044 = vunpack.c.l.b16 %v2005
          %v2045 = vunpack.c.l.b16 %v2006
          %v2046 = vunpack.c.l.b16 %v2007
          %v2047 = vunpack.c.l.b16 %v2008
          %v2048 = vunpack.c.l.b16 %v2009
          %v2049 = vunpack.c.l.b16 %v2010
          %v2050 = vunpack.c.l.b16 %v2011
          %v2051 = vunpack.c.l.b16 %v2012
          %v2052 = vunpack.c.l.b16 %v2013
          %v2053 = vunpack.c.l.b16 %v2014
          %v2054 = vunpack.c.l.b16 %v2015
          %v2055 = vunpack.c.l.b16 %v2016
          %v2056 = vunpack.c.l.b16 %v2017
          %v2057 = vunpack.c.l.b16 %v2018
          %v2058 = vunpack.c.l.b16 %v2019
          %v2059 = vunpack.c.l.b16 %v2020
          %v2060 = vpack.c.b16 %v2045, %v2044
          %v2061 = vpack.c.b16 %v2047, %v2046
          %v2062 = vpack.c.b16 %v2049, %v2048
          %v2063 = vpack.c.b16 %v2051, %v2050
          %v2064 = vpack.c.b16 %v2053, %v2052
          %v2065 = vpack.c.b16 %v2055, %v2054
          %v2066 = vpack.c.b16 %v2057, %v2056
          %v2067 = vpack.c.b16 %v2059, %v2058
          %2076 = vmatprep.subr.bf16.mxu0 0
          %2077 = vmatpush1.bf16.msra.mxu0 %v2067
          %2078 = vmatprep.subr.bf16.mxu0 0
          %2079 = vmatpush1.bf16.msra.mxu0 %v2066
          %2080 = vmatprep.subr.bf16.mxu0 0
          %2081 = vmatpush1.bf16.msra.mxu0 %v2065
          %2082 = vmatprep.subr.bf16.mxu0 0
          %2083 = vmatpush1.bf16.msra.mxu0 %v2064
          %2084 = vmatprep.subr.bf16.mxu0 0
          %2085 = vmatpush1.bf16.msra.mxu0 %v2063
          %2086 = vmatprep.subr.bf16.mxu0 0
          %2087 = vmatpush1.bf16.msra.mxu0 %v2062
          %2088 = vmatprep.subr.bf16.mxu0 0
          %2089 = vmatpush1.bf16.msra.mxu0 %v2061
          %2090 = vmatprep.subr.bf16.mxu0 0
          %2091 = vmatpush1.bf16.msra.mxu0 %v2060
          %2092 = vmatprep.subr.bf16.mxu0 0
          %2093 = vmatpush2.bf16.msra.mxu0 0
          %2094 = vmatprep.subr.bf16.mxu0 0
          %2095 = vmatpush2.bf16.msra.mxu0 0
          %2096 = vmatprep.subr.bf16.mxu0 0
          %2097 = vmatpush2.bf16.msra.mxu0 0
          %2098 = vmatprep.subr.bf16.mxu0 0
          %2099 = vmatpush2.bf16.msra.mxu0 0
          %2100 = vmatprep.subr.bf16.mxu0 0
          %2101 = vmatpush2.bf16.msra.mxu0 0
          %2102 = vmatprep.subr.bf16.mxu0 0
          %2103 = vmatpush2.bf16.msra.mxu0 0
          %2104 = vmatprep.subr.bf16.mxu0 0
          %2105 = vmatpush2.bf16.msra.mxu0 0
          %2106 = vmatprep.subr.bf16.mxu0 0
          %2107 = vmatpush2.bf16.msra.mxu0 0
          %2108 = vmatprep.mubr.bf16.mxu0 0
          %2109 = vmatmul.mubr.bf16.gmra.mxu0 %v2004
          %v2110 = vpop.f32.mrf.mxu0
          %v2111 = vadd.f32 %v2026, %v2110
          %v2112 = vpop.f32.mrf.mxu0
          %v2113 = vpop.f32.mrf.mxu0
          %v2114 = vadd.f32 %v2026, %v2113
          %v2115 = vpop.f32.mrf.mxu0
          %2116 = vdwg.mxu0
          %v2117 = vmax.f32 %v2111, 0.0
          %v2118 = vmax.f32 %v2114, 0.0
          %v2119 = vpack.c.bf16 %v2118, %v2117
          %v2120 = vld [vmem:[%s16] sm:$0xf]
          %v2121 = vld [vmem:[%s16 + $0x4] sm:$0xf]
          %v2122 = vld [vmem:[%s16 + $0x8] sm:$0xf]
          %v2123 = vld [vmem:[%s16 + $0xc] sm:$0xf]
          %v2124 = vld [vmem:[%s16 + $0x10] sm:$0xf]
          %v2125 = vld [vmem:[%s16 + $0x14] sm:$0xf]
          %v2126 = vld [vmem:[%s16 + $0x18] sm:$0xf]
          %v2127 = vld [vmem:[%s16 + $0x1c] sm:$0xf]
          %v2128 = vld [vmem:[%s16 + $0x20] sm:$0xf]
          %v2129 = vld [vmem:[%s16 + $0x24] sm:$0xf]
          %v2130 = vld [vmem:[%s16 + $0x28] sm:$0xf]
          %v2131 = vld [vmem:[%s16 + $0x2c] sm:$0xf]
          %v2132 = vld [vmem:[%s16 + $0x30] sm:$0xf]
          %v2133 = vld [vmem:[%s16 + $0x34] sm:$0xf]
          %v2134 = vld [vmem:[%s16 + $0x38] sm:$0xf]
          %v2135 = vld [vmem:[%s16 + $0x3c] sm:$0xf]
          %v2136 = vpack.c.bf16 %v1879, %v1874
          %v2137 = vld [vmem:[#allocation15] sm:$0xf]
          %v2138 = vld [vmem:[#allocation15 + $0x4] sm:$0xf]
          %v2139 = vld [vmem:[#allocation15 + $0x8] sm:$0xf]
          %v2140 = vld [vmem:[#allocation15 + $0xc] sm:$0xf]
          %v2141 = vld [vmem:[#allocation15 + $0x10] sm:$0xf]
          %v2142 = vld [vmem:[#allocation15 + $0x14] sm:$0xf]
          %v2143 = vld [vmem:[#allocation15 + $0x18] sm:$0xf]
          %v2144 = vld [vmem:[#allocation15 + $0x1c] sm:$0xf]
          %v2145 = vld [vmem:[#allocation15 + $0x20] sm:$0xf]
          %v2146 = vld [vmem:[#allocation15 + $0x24] sm:$0xf]
          %v2147 = vld [vmem:[#allocation15 + $0x28] sm:$0xf]
          %v2148 = vld [vmem:[#allocation15 + $0x2c] sm:$0xf]
          %v2149 = vld [vmem:[#allocation15 + $0x30] sm:$0xf]
          %v2150 = vld [vmem:[#allocation15 + $0x34] sm:$0xf]
          %v2151 = vld [vmem:[#allocation15 + $0x38] sm:$0xf]
          %v2152 = vld [vmem:[#allocation15 + $0x3c] sm:$0xf]
          %v2169 = vunpack.c.l.b16 %v2137
          %v2170 = vunpack.c.l.b16 %v2138
          %v2171 = vunpack.c.l.b16 %v2139
          %v2172 = vunpack.c.l.b16 %v2140
          %v2173 = vunpack.c.l.b16 %v2141
          %v2174 = vunpack.c.l.b16 %v2142
          %v2175 = vunpack.c.l.b16 %v2143
          %v2176 = vunpack.c.l.b16 %v2144
          %v2177 = vunpack.c.l.b16 %v2145
          %v2178 = vunpack.c.l.b16 %v2146
          %v2179 = vunpack.c.l.b16 %v2147
          %v2180 = vunpack.c.l.b16 %v2148
          %v2181 = vunpack.c.l.b16 %v2149
          %v2182 = vunpack.c.l.b16 %v2150
          %v2183 = vunpack.c.l.b16 %v2151
          %v2184 = vunpack.c.l.b16 %v2152
          %v2185 = vpack.c.b16 %v2170, %v2169
          %v2186 = vpack.c.b16 %v2172, %v2171
          %v2187 = vpack.c.b16 %v2174, %v2173
          %v2188 = vpack.c.b16 %v2176, %v2175
          %v2189 = vpack.c.b16 %v2178, %v2177
          %v2190 = vpack.c.b16 %v2180, %v2179
          %v2191 = vpack.c.b16 %v2182, %v2181
          %v2192 = vpack.c.b16 %v2184, %v2183
          %2201 = vmatprep.subr.bf16.mxu0 0
          %2202 = vmatpush1.bf16.msra.mxu0 %v2192
          %2203 = vmatprep.subr.bf16.mxu0 0
          %2204 = vmatpush1.bf16.msra.mxu0 %v2191
          %2205 = vmatprep.subr.bf16.mxu0 0
          %2206 = vmatpush1.bf16.msra.mxu0 %v2190
          %2207 = vmatprep.subr.bf16.mxu0 0
          %2208 = vmatpush1.bf16.msra.mxu0 %v2189
          %2209 = vmatprep.subr.bf16.mxu0 0
          %2210 = vmatpush1.bf16.msra.mxu0 %v2188
          %2211 = vmatprep.subr.bf16.mxu0 0
          %2212 = vmatpush1.bf16.msra.mxu0 %v2187
          %2213 = vmatprep.subr.bf16.mxu0 0
          %2214 = vmatpush1.bf16.msra.mxu0 %v2186
          %2215 = vmatprep.subr.bf16.mxu0 0
          %2216 = vmatpush1.bf16.msra.mxu0 %v2185
          %2217 = vmatprep.subr.bf16.mxu0 0
          %2218 = vmatpush2.bf16.msra.mxu0 0
          %2219 = vmatprep.subr.bf16.mxu0 0
          %2220 = vmatpush2.bf16.msra.mxu0 0
          %2221 = vmatprep.subr.bf16.mxu0 0
          %2222 = vmatpush2.bf16.msra.mxu0 0
          %2223 = vmatprep.subr.bf16.mxu0 0
          %2224 = vmatpush2.bf16.msra.mxu0 0
          %2225 = vmatprep.subr.bf16.mxu0 0
          %2226 = vmatpush2.bf16.msra.mxu0 0
          %2227 = vmatprep.subr.bf16.mxu0 0
          %2228 = vmatpush2.bf16.msra.mxu0 0
          %2229 = vmatprep.subr.bf16.mxu0 0
          %2230 = vmatpush2.bf16.msra.mxu0 0
          %2231 = vmatprep.subr.bf16.mxu0 0
          %2232 = vmatpush2.bf16.msra.mxu0 0
          %2233 = vmatprep.mubr.bf16.mxu0 0
          %2234 = vmatmul.mubr.bf16.gmra.mxu0 %v2136
          %v2235 = vpop.f32.mrf.mxu0
          %v2236 = vadd.f32 0.0, %v2235
          %v2237 = vpop.f32.mrf.mxu0
          %v2238 = vpop.f32.mrf.mxu0
          %v2239 = vadd.f32 0.0, %v2238
          %v2240 = vpop.f32.mrf.mxu0
          %2241 = vdwg.mxu0
          %v2258 = vunpack.c.l.b16 %v2120
          %v2259 = vunpack.c.l.b16 %v2121
          %v2260 = vunpack.c.l.b16 %v2122
          %v2261 = vunpack.c.l.b16 %v2123
          %v2262 = vunpack.c.l.b16 %v2124
          %v2263 = vunpack.c.l.b16 %v2125
          %v2264 = vunpack.c.l.b16 %v2126
          %v2265 = vunpack.c.l.b16 %v2127
          %v2266 = vunpack.c.l.b16 %v2128
          %v2267 = vunpack.c.l.b16 %v2129
          %v2268 = vunpack.c.l.b16 %v2130
          %v2269 = vunpack.c.l.b16 %v2131
          %v2270 = vunpack.c.l.b16 %v2132
          %v2271 = vunpack.c.l.b16 %v2133
          %v2272 = vunpack.c.l.b16 %v2134
          %v2273 = vunpack.c.l.b16 %v2135
          %v2274 = vpack.c.b16 %v2259, %v2258
          %v2275 = vpack.c.b16 %v2261, %v2260
          %v2276 = vpack.c.b16 %v2263, %v2262
          %v2277 = vpack.c.b16 %v2265, %v2264
          %v2278 = vpack.c.b16 %v2267, %v2266
          %v2279 = vpack.c.b16 %v2269, %v2268
          %v2280 = vpack.c.b16 %v2271, %v2270
          %v2281 = vpack.c.b16 %v2273, %v2272
          %2290 = vmatprep.subr.bf16.mxu0 0
          %2291 = vmatpush1.bf16.msra.mxu0 %v2281
          %2292 = vmatprep.subr.bf16.mxu0 0
          %2293 = vmatpush1.bf16.msra.mxu0 %v2280
          %2294 = vmatprep.subr.bf16.mxu0 0
          %2295 = vmatpush1.bf16.msra.mxu0 %v2279
          %2296 = vmatprep.subr.bf16.mxu0 0
          %2297 = vmatpush1.bf16.msra.mxu0 %v2278
          %2298 = vmatprep.subr.bf16.mxu0 0
          %2299 = vmatpush1.bf16.msra.mxu0 %v2277
          %2300 = vmatprep.subr.bf16.mxu0 0
          %2301 = vmatpush1.bf16.msra.mxu0 %v2276
          %2302 = vmatprep.subr.bf16.mxu0 0
          %2303 = vmatpush1.bf16.msra.mxu0 %v2275
          %2304 = vmatprep.subr.bf16.mxu0 0
          %2305 = vmatpush1.bf16.msra.mxu0 %v2274
          %2306 = vmatprep.subr.bf16.mxu0 0
          %2307 = vmatpush2.bf16.msra.mxu0 0
          %2308 = vmatprep.subr.bf16.mxu0 0
          %2309 = vmatpush2.bf16.msra.mxu0 0
          %2310 = vmatprep.subr.bf16.mxu0 0
          %2311 = vmatpush2.bf16.msra.mxu0 0
          %2312 = vmatprep.subr.bf16.mxu0 0
          %2313 = vmatpush2.bf16.msra.mxu0 0
          %2314 = vmatprep.subr.bf16.mxu0 0
          %2315 = vmatpush2.bf16.msra.mxu0 0
          %2316 = vmatprep.subr.bf16.mxu0 0
          %2317 = vmatpush2.bf16.msra.mxu0 0
          %2318 = vmatprep.subr.bf16.mxu0 0
          %2319 = vmatpush2.bf16.msra.mxu0 0
          %2320 = vmatprep.subr.bf16.mxu0 0
          %2321 = vmatpush2.bf16.msra.mxu0 0
          %2322 = vmatprep.mubr.bf16.mxu0 0
          %2323 = vmatmul.mubr.bf16.gmra.mxu0 %v2119
          %v2324 = vpop.f32.mrf.mxu0
          %v2325 = vadd.f32 %v2236, %v2324
          %v2326 = vpop.f32.mrf.mxu0
          %v2327 = vpop.f32.mrf.mxu0
          %v2328 = vadd.f32 %v2239, %v2327
          %v2329 = vpop.f32.mrf.mxu0
          %2330 = vdwg.mxu0
          %v2331 = vld [vmem:[#allocation16] sm:$0x1]
          %v2333 = vlaneseq
          %v2334 = vshrl.u32 %v2333, 7
          %v2335 = vsub.s32 0, %v2334
          %v2336 = vrot.slane %v2331, %v2335
          %v2338 = vadd.f32 %v2325, %v2336
          %v2339 = vadd.f32 %v2328, %v2336
          %v2340 = vmax.f32 %v2338, 0.0
          %v2341 = vmax.f32 %v2339, 0.0
          %v2342 = vld [vmem:[%s19] sm:$0xff]
          %v2343 = vld [vmem:[%s771] sm:$0xff]
          %v2344 = vld [vmem:[%s771 + $0x8] sm:$0xff]
          %2345 = vxpose.xlu0.b32.start [1/16] %v2343, 128
          %2346 = vxpose.xlu0.b32.cont [2/16] %v2344, 128
          %2347 = vxpose.xlu0.b32.cont [3/16] 0.0, 128
          %2348 = vxpose.xlu0.b32.cont [4/16] 0.0, 128
          %2349 = vxpose.xlu0.b32.cont [5/16] 0.0, 128
          %2350 = vxpose.xlu0.b32.cont [6/16] 0.0, 128
          %2351 = vxpose.xlu0.b32.cont [7/16] 0.0, 128
          %2352 = vxpose.xlu0.b32.cont [8/16] 0.0, 128
          %2353 = vxpose.xlu0.b32.cont [9/16] 0.0, 128
          %2354 = vxpose.xlu0.b32.cont [10/16] 0.0, 128
          %2355 = vxpose.xlu0.b32.cont [11/16] 0.0, 128
          %2356 = vxpose.xlu0.b32.cont [12/16] 0.0, 128
          %2357 = vxpose.xlu0.b32.cont [13/16] 0.0, 128
          %2358 = vxpose.xlu0.b32.cont [14/16] 0.0, 128
          %2359 = vxpose.xlu0.b32.cont [15/16] 0.0, 128
          %2360 = vxpose.xlu0.b32.end [16/16] 0.0, 128
          %v2361 = vpop.trf.xlu0
          %v2362 = vpop.trf.xlu0
          %v2363 = vpop.trf.xlu0
          %v2364 = vpop.trf.xlu0
          %v2365 = vpop.trf.xlu0
          %v2366 = vpop.trf.xlu0
          %v2367 = vpop.trf.xlu0
          %v2368 = vpop.trf.xlu0
          %v2369 = vpop.trf.xlu0
          %v2370 = vpop.trf.xlu0
          %v2371 = vpop.trf.xlu0
          %v2372 = vpop.trf.xlu0
          %v2373 = vpop.trf.xlu0
          %v2374 = vpop.trf.xlu0
          %v2375 = vpop.trf.xlu0
          %v2376 = vpop.trf.xlu0
          %vm2377 = vcmask 130048
          %v2379 = vsel %vm2377, %v2361, 0
          %2381 = vmatprep.subr.mxu0 0.0
          %2382 = vmatpush1.msra.mxu0 0.0
          %2383 = vmatprep.subr.mxu0 0.0
          %2384 = vmatpush1.msra.mxu0 0.0
          %2385 = vmatprep.subr.mxu0 0.0
          %2386 = vmatpush1.msra.mxu0 0.0
          %2387 = vmatprep.subr.mxu0 0.0
          %2388 = vmatpush1.msra.mxu0 0.0
          %2389 = vmatprep.subr.mxu0 0.0
          %2390 = vmatpush1.msra.mxu0 0.0
          %2391 = vmatprep.subr.mxu0 0.0
          %2392 = vmatpush1.msra.mxu0 0.0
          %2393 = vmatprep.subr.mxu0 0.0
          %2394 = vmatpush1.msra.mxu0 0.0
          %2395 = vmatprep.subr.mxu0 0.0
          %2396 = vmatpush1.msra.mxu0 0.0
          %2397 = vmatprep.subr.mxu0 0.0
          %2398 = vmatpush1.msra.mxu0 0.0
          %2399 = vmatprep.subr.mxu0 0.0
          %2400 = vmatpush1.msra.mxu0 0.0
          %2401 = vmatprep.subr.mxu0 0.0
          %2402 = vmatpush1.msra.mxu0 0.0
          %2403 = vmatprep.subr.mxu0 0.0
          %2404 = vmatpush1.msra.mxu0 0.0
          %2405 = vmatprep.subr.mxu0 0.0
          %2406 = vmatpush1.msra.mxu0 0.0
          %2407 = vmatprep.subr.mxu0 0.0
          %2408 = vmatpush1.msra.mxu0 0.0
          %2409 = vmatprep.subr.mxu0 0.0
          %2410 = vmatpush1.msra.mxu0 %v2341
          %2411 = vmatprep.subr.mxu0 0.0
          %2412 = vmatpush1.msra.mxu0 %v2340
          %2413 = vmatprep.subr.mxu0 0.0
          %2414 = vmatpush2.msra.mxu0 0.0
          %2415 = vmatprep.subr.mxu0 0.0
          %2416 = vmatpush2.msra.mxu0 0.0
          %2417 = vmatprep.subr.mxu0 0.0
          %2418 = vmatpush2.msra.mxu0 0.0
          %2419 = vmatprep.subr.mxu0 0.0
          %2420 = vmatpush2.msra.mxu0 0.0
          %2421 = vmatprep.subr.mxu0 0.0
          %2422 = vmatpush2.msra.mxu0 0.0
          %2423 = vmatprep.subr.mxu0 0.0
          %2424 = vmatpush2.msra.mxu0 0.0
          %2425 = vmatprep.subr.mxu0 0.0
          %2426 = vmatpush2.msra.mxu0 0.0
          %2427 = vmatprep.subr.mxu0 0.0
          %2428 = vmatpush2.msra.mxu0 0.0
          %2429 = vmatprep.subr.mxu0 0.0
          %2430 = vmatpush2.msra.mxu0 0.0
          %2431 = vmatprep.subr.mxu0 0.0
          %2432 = vmatpush2.msra.mxu0 0.0
          %2433 = vmatprep.subr.mxu0 0.0
          %2434 = vmatpush2.msra.mxu0 0.0
          %2435 = vmatprep.subr.mxu0 0.0
          %2436 = vmatpush2.msra.mxu0 0.0
          %2437 = vmatprep.subr.mxu0 0.0
          %2438 = vmatpush2.msra.mxu0 0.0
          %2439 = vmatprep.subr.mxu0 0.0
          %2440 = vmatpush2.msra.mxu0 0.0
          %2441 = vmatprep.subr.mxu0 0.0
          %2442 = vmatpush2.msra.mxu0 0.0
          %2443 = vmatprep.subr.mxu0 0.0
          %2444 = vmatpush2.msra.mxu0 0.0
          %2445 = vmatprep.mubr.f32.mxu0 0.0
          %2446 = vmatmul.mubr.f32.gmra.mxu0 %v2379
          %v2447 = vpop.f32.mrf.mxu0
          %v2448 = vadd.f32 0.0, %v2447
          %v2449 = vpop.f32.mrf.mxu0
          %2450 = vdwg.mxu0
          %v2451 = vadd.f32 %v2342, %v2448
          %2452 = vst [vmem:[%s19] sm:$0xff] %v2451
        $region148: #{mpn_encoder_forward.1} parent=95 // pred_fallthru
          _
        // Predicated region
        $region149: #{mpn_encoder_forward.1} parent=95 // pred_check
          %p2453 = pneg %p479
        $region150: #{mpn_encoder_forward.1} parent=95 // pred_check_branch
          %2455 = sbr.rel (%p2453) target = $region152
        $region151: #{mpn_encoder_forward.1} parent=95 // pred_region
          _
        $region152: #{mpn_encoder_forward.1} parent=95 // pred_fallthru
          _
        // Predicated region
        $region153: #{mpn_encoder_forward.1} parent=95 // pred_check
          %p2456 = pneg %p479
        $region154: #{mpn_encoder_forward.1} parent=95 // pred_check_branch
          %2458 = sbr.rel (%p2456) target = $region156
        $region155: #{mpn_encoder_forward.1} parent=95 // pred_region
          _
        $region156: #{mpn_encoder_forward.1} parent=95 // pred_fallthru
          _
      $region96: #{mpn_encoder_forward.1} parent=5 // pred_fallthru
        _
      %p2459 = scmp.le.s32.totalorder 2, %s30
      // Predicated region
      $region157: #{mpn_encoder_forward.1} parent=5 // pred_check
        %p2460 = pneg %p2459
      $region158: #{mpn_encoder_forward.1} parent=5 // pred_check_branch
        %2462 = sbr.rel (%p2460) target = $region160
      $region159: #{mpn_encoder_forward.1} parent=5 // pred_region
        %s2463 = ssub.s32 %s30, 2
      $region160: #{mpn_encoder_forward.1} parent=5 // pred_fallthru
        _
    $region6: #{mpn_encoder_forward.1} parent=1 // loop_footer
      %s34 = sadd.s32 1, %s30
    $region7: #{mpn_encoder_forward.1} parent=1 // loop_footer_branch
      %29 = sbr.rel target = $region3
    $region8: #{mpn_encoder_forward.1} parent=1 // loop_exit
      _
    %2464 = vsyncpa [#allocation6], 1
    %s2465 = scalar_lea.sflag [#allocation6], 1
    %2466 = vsyncpa %s2465, 1
    %2467 = vsyncpa [#allocation8], 1
    %2468 = vsyncpa [#allocation11], 1
    %2469 = vsyncpa [#allocation14], 1
    %2470 = vsyncpa [#allocation17], 1

</llo_original>
